<compile_context>
chip_gen: v7x
topology: tpu7x:2x2x1
jax: 0.10.0
libtpu: 0.0.40
codegen_flags: <defaults>
</compile_context>

<pallas_src>
import functools

import jax
import jax.numpy as jnp
from jax.experimental import pallas as pl
from jax.experimental.pallas import tpu as pltpu


# ============================================================================
# Pallas kernel: matmul with fused (relu_before, BN affine, residual, relu_after)
# ============================================================================
def _make_fused_kernel(relu_before, relu_after, has_residual):
    def kernel(a_ref, w_ref, s_ref, t_ref, *rest):
        if has_residual:
            r_ref, o_ref = rest
        else:
            (o_ref,) = rest
            r_ref = None
        acc = jnp.dot(a_ref[...], w_ref[...],
                      preferred_element_type=jnp.float32)   # bf16 x bf16 -> f32
        if relu_before:
            acc = jnp.maximum(acc, 0.0)
        acc = acc * s_ref[...] + t_ref[...]                  # BN affine (f32)
        if r_ref is not None:
            acc = acc + r_ref[...]
        if relu_after:
            acc = jnp.maximum(acc, 0.0)
        o_ref[...] = acc
    return kernel


def _pick_tm(m):
    """Largest M-tile that divides m exactly, preferring >= 2 grid steps."""
    if m % 8 != 0:
        return m                           # single full-array block, no padding
    target = max(8, min(256, m // 2))      # aim for >= 2 "parallel" grid steps
    for tm in (256, 128, 64, 32, 16, 8):
        if tm <= target and m % tm == 0:
            return tm
    return m


def fused_matmul_bn(a, w, scale, shift, residual=None,
                    relu_before=False, relu_after=False):
    """out = epilogue(a @ w) with epilogue = [relu?] * scale + shift [+res] [relu?].

    a: (M, K) f32, w: (K, N) f32, scale/shift: (N,) f32, residual: (M, N) f32.
    MXU operands are cast to bf16; accumulation & epilogue math stay f32."""
    M, K = a.shape
    N = w.shape[1]
    tm = _pick_tm(M)
    grid = (M // tm,)

    inputs = [a.astype(jnp.bfloat16),
              w.astype(jnp.bfloat16),
              scale.reshape(1, N).astype(jnp.float32),
              shift.reshape(1, N).astype(jnp.float32)]
    in_specs = [
        pl.BlockSpec((tm, K), lambda i: (i, 0)),
        pl.BlockSpec((K, N), lambda i: (0, 0)),
        pl.BlockSpec((1, N), lambda i: (0, 0)),
        pl.BlockSpec((1, N), lambda i: (0, 0)),
    ]
    if residual is not None:
        inputs.append(residual.astype(jnp.float32))
        in_specs.append(pl.BlockSpec((tm, N), lambda i: (i, 0)))

    kernel = _make_fused_kernel(relu_before, relu_after, residual is not None)
    return pl.pallas_call(
        kernel,
        out_shape=jax.ShapeDtypeStruct((M, N), jnp.float32),
        grid=grid,
        in_specs=in_specs,
        out_specs=pl.BlockSpec((tm, N), lambda i: (i, 0)),
        compiler_params=pltpu.CompilerParams(dimension_semantics=("parallel",)),
    )(*inputs)


# ============================================================================
# JAX glue: im2col, weight layout, BN folding, BasicBlock forward
# ============================================================================
def _im2col(x, kh, kw, stride, pad):
    """x: (B, H, W, C) NHWC -> patches (B*Ho*Wo, kh*kw*C), Ho, Wo."""
    B, H, W, C = x.shape
    xp = jnp.pad(x, ((0, 0), (pad, pad), (pad, pad), (0, 0)))
    Ho = (H + 2 * pad - kh) // stride + 1
    Wo = (W + 2 * pad - kw) // stride + 1
    cols = []
    for i in range(kh):
        for j in range(kw):
            cols.append(xp[:, i:i + stride * Ho:stride, j:j + stride * Wo:stride, :])
    patches = jnp.concatenate(cols, axis=-1)                 # (B, Ho, Wo, kh*kw*C)
    return patches.reshape(B * Ho * Wo, kh * kw * C), Ho, Wo


def _w_to_mat(w):
    """torch conv weight (Cout, Cin, KH, KW) -> matmul weight (KH*KW*Cin, Cout)."""
    cout, cin, kh, kw = w.shape
    return jnp.transpose(w, (2, 3, 1, 0)).reshape(kh * kw * cin, cout)


def bn_scale_shift(bn, eps=1e-5):
    scale = bn["gamma"] / jnp.sqrt(bn["rv"] + eps)
    shift = bn["beta"] - bn["rm"] * scale
    return scale, shift


def basic_block_forward(params, x_nchw):
    """BasicBlock forward. x_nchw: (B, Cin, H, W) -> (B, planes, Ho, Wo)."""
    x = jnp.transpose(x_nchw, (0, 2, 3, 1))                  # NHWC
    B, H, W, Cin = x.shape
    stride = params["stride"]

    # conv1 (3x3, stride, bias=False) -> ReLU -> BN1   [one fused kernel]
    a1, Ho, Wo = _im2col(x, 3, 3, stride, 1)
    s1, t1 = bn_scale_shift(params["bn1"])
    h = fused_matmul_bn(a1, _w_to_mat(params["conv1_w"]), s1, t1,
                        relu_before=True)
    planes = h.shape[-1]
    h_nhwc = h.reshape(B, Ho, Wo, planes)

    # residual branch (optionally downsample = conv1x1 + BN)  [one fused kernel]
    if params["downsample"] is not None:
        ds = params["downsample"]
        xs = x[:, ::stride, ::stride, :][:, :Ho, :Wo, :]
        a_d = xs.reshape(B * Ho * Wo, Cin)
        sd, td = bn_scale_shift(ds["bn"])
        residual = fused_matmul_bn(a_d, _w_to_mat(ds["conv_w"]), sd, td)
    else:
        residual = x.reshape(B * Ho * Wo, Cin)

    # conv2 (3x3, bias=False) -> BN2 -> + residual -> ReLU   [one fused kernel]
    a2, _, _ = _im2col(h_nhwc, 3, 3, 1, 1)
    s2, t2 = bn_scale_shift(params["bn2"])
    out = fused_matmul_bn(a2, _w_to_mat(params["conv2_w"]), s2, t2,
                          residual=residual, relu_after=True)
    return jnp.transpose(out.reshape(B, Ho, Wo, planes), (0, 3, 1, 2))


# ============================================================================
# Pure-JAX reference (same bf16 MXU operands, f32 accumulation) for checking
# ============================================================================
def _conv_ref(x_nhwc, w_torch, stride, padding):
    w_hwio = jnp.transpose(w_torch, (2, 3, 1, 0))            # KH, KW, Cin, Cout
    return jax.lax.conv_general_dilated(
        x_nhwc.astype(jnp.bfloat16), w_hwio.astype(jnp.bfloat16),
        window_strides=(stride, stride),
        padding=[(padding, padding), (padding, padding)],
        dimension_numbers=("NHWC", "HWIO", "NHWC"),
        preferred_element_type=jnp.float32)


def basic_block_ref(params, x_nchw):
    x = jnp.transpose(x_nchw, (0, 2, 3, 1))
    stride = params["stride"]
    out = _conv_ref(x, params["conv1_w"], stride, 1)
    out = jnp.maximum(out, 0.0)                              # relu BEFORE bn1
    s1, t1 = bn_scale_shift(params["bn1"])
    out = out * s1 + t1
    out = _conv_ref(out, params["conv2_w"], 1, 1)
    s2, t2 = bn_scale_shift(params["bn2"])
    out = out * s2 + t2
    if params["downsample"] is not None:
        ds = params["downsample"]
        residual = _conv_ref(x, ds["conv_w"], stride, 0)
        sd, td = bn_scale_shift(ds["bn"])
        residual = residual * sd + td
    else:
        residual = x
    out = jnp.maximum(out + residual, 0.0)
    return jnp.transpose(out, (0, 3, 1, 2))


# ============================================================================
# Deterministic synthetic parameters
# ============================================================================
class ParamGen:
    def __init__(self, key):
        self._key = key
        self._i = 0

    def normal(self, shape, scale=1.0):
        self._i += 1
        k = jax.random.fold_in(self._key, self._i)
        return (scale * jax.random.normal(k, shape)).astype(jnp.float32)


def bn_p(pg, c):
    return {"gamma": 1.0 + pg.normal((c,), 0.1),
            "beta": pg.normal((c,), 0.1),
            "rm": pg.normal((c,), 0.1),
            "rv": 1.0 + jnp.abs(pg.normal((c,), 0.1))}


def build_block_params(key, inplanes, planes, stride):
    pg = ParamGen(key)
    need_ds = (stride != 1) or (inplanes != planes)
    p = {"stride": stride,
         "conv1_w": pg.normal((planes, inplanes, 3, 3), (inplanes * 9) ** -0.5),
         "bn1": bn_p(pg, planes),
         "conv2_w": pg.normal((planes, planes, 3, 3), (planes * 9) ** -0.5),
         "bn2": bn_p(pg, planes),
         "downsample": None}
    if need_ds:
        p["downsample"] = {"conv_w": pg.normal((planes, inplanes, 1, 1),
                                               inplanes ** -0.5),
                           "bn": bn_p(pg, planes)}
    return p


# ============================================================================
if __name__ == "__main__":
    root = jax.random.PRNGKey(0)
    k_a, k_b, k_x = jax.random.split(root, 3)
    x = jax.random.normal(k_x, (2, 4, 16, 16), jnp.float32)   # NCHW

    configs = [
        # (params, expected output shape)
        (build_block_params(k_a, inplanes=4, planes=4, stride=1), (2, 4, 16, 16)),
        (build_block_params(k_b, inplanes=4, planes=8, stride=2), (2, 8, 8, 8)),
    ]

    for params, expected_shape in configs:
        fwd = jax.jit(functools.partial(basic_block_forward, params))
        out = jax.block_until_ready(fwd(x))
        assert out.shape == expected_shape, out.shape
        assert bool(jnp.all(jnp.isfinite(out)))
        ref = basic_block_ref(params, x)
        err = float(jnp.max(jnp.abs(out - ref)))
        assert err < 1e-2, f"max abs diff vs reference: {err}"

    print("KERNEL_OK")
</pallas_src>

<mosaic_0001>
module attributes {stable_mosaic.version = 11 : i64} {
  func.func @kernel(%arg0: i32, %arg1: memref<256x36xbf16, #tpu.memory_space<vmem>>, %arg2: memref<36x4xbf16, #tpu.memory_space<vmem>>, %arg3: memref<1x4xf32, #tpu.memory_space<vmem>>, %arg4: memref<1x4xf32, #tpu.memory_space<vmem>>, %arg5: memref<256x4xf32, #tpu.memory_space<vmem>>) attributes {dimension_semantics = [#tpu.dimension_semantics<parallel>], iteration_bounds = array<i64: 2>, scalar_prefetch = 0 : i64, scratch_operands = 0 : i64, tpu.core_type = #tpu.core_type<tc>, window_params = [{transform_indices = @transform_0, window_bounds = array<i64: 256, 36>}, {pipeline_mode = #tpu.pipeline_mode<synchronous>, transform_indices = @transform_1, window_bounds = array<i64: 36, 4>}, {pipeline_mode = #tpu.pipeline_mode<synchronous>, transform_indices = @transform_2, window_bounds = array<i64: 1, 4>}, {pipeline_mode = #tpu.pipeline_mode<synchronous>, transform_indices = @transform_3, window_bounds = array<i64: 1, 4>}, {transform_indices = @transform_4, window_bounds = array<i64: 256, 4>}]} {
    %c0 = arith.constant 0 : index
    %c0_0 = arith.constant 0 : index
    %0 = vector.load %arg1[%c0, %c0_0] : memref<256x36xbf16, #tpu.memory_space<vmem>>, vector<256x36xbf16>
    %c0_1 = arith.constant 0 : index
    %c0_2 = arith.constant 0 : index
    %1 = vector.load %arg2[%c0_1, %c0_2] : memref<36x4xbf16, #tpu.memory_space<vmem>>, vector<36x4xbf16>
    %cst = arith.constant dense<0.000000e+00> : vector<256x4xf32>
    %2 = tpu.matmul %0, %1, %cst {dimension_numbers = #tpu.dot_dimension_numbers<[1], [0], [0], [1], [0, 0, 1, 1], [], []>} : vector<256x36xbf16>, vector<36x4xbf16>, vector<256x4xf32> -> vector<256x4xf32>
    %cst_3 = arith.constant 0.000000e+00 : f32
    %3 = vector.broadcast %cst_3 : f32 to vector<256x4xf32>
    %4 = arith.maximumf %2, %3 : vector<256x4xf32>
    %c0_4 = arith.constant 0 : index
    %c0_5 = arith.constant 0 : index
    %5 = vector.load %arg3[%c0_4, %c0_5] : memref<1x4xf32, #tpu.memory_space<vmem>>, vector<1x4xf32>
    %6 = vector.broadcast %5 : vector<1x4xf32> to vector<256x4xf32>
    %7 = arith.mulf %4, %6 : vector<256x4xf32>
    %c0_6 = arith.constant 0 : index
    %c0_7 = arith.constant 0 : index
    %8 = vector.load %arg4[%c0_6, %c0_7] : memref<1x4xf32, #tpu.memory_space<vmem>>, vector<1x4xf32>
    %9 = vector.broadcast %8 : vector<1x4xf32> to vector<256x4xf32>
    %10 = arith.addf %7, %9 : vector<256x4xf32>
    %c0_8 = arith.constant 0 : index
    %c0_9 = arith.constant 0 : index
    %11 = vector.load %arg5[%c0_8, %c0_9] : memref<256x4xf32, #tpu.memory_space<vmem>>, vector<256x4xf32>
    tpu.vector_store %arg5[%c0_8, %c0_9], %10 {strides = array<i32>} : memref<256x4xf32, #tpu.memory_space<vmem>>, vector<256x4xf32>,
    return
  }
  func.func @transform_0(%arg0: i32) -> (i32, i32) {
    %c0_i32 = arith.constant 0 : i32
    %c0_i32_0 = arith.constant 0 : i32
    return %arg0, %c0_i32 : i32, i32
  }
  func.func @transform_1(%arg0: i32) -> (i32, i32) {
    %c0_i32 = arith.constant 0 : i32
    %c0_i32_0 = arith.constant 0 : i32
    %c0_i32_1 = arith.constant 0 : i32
    return %c0_i32, %c0_i32_0 : i32, i32
  }
  func.func @transform_2(%arg0: i32) -> (i32, i32) {
    %c0_i32 = arith.constant 0 : i32
    %c0_i32_0 = arith.constant 0 : i32
    %c0_i32_1 = arith.constant 0 : i32
    return %c0_i32, %c0_i32_0 : i32, i32
  }
  func.func @transform_3(%arg0: i32) -> (i32, i32) {
    %c0_i32 = arith.constant 0 : i32
    %c0_i32_0 = arith.constant 0 : i32
    %c0_i32_1 = arith.constant 0 : i32
    return %c0_i32, %c0_i32_0 : i32, i32
  }
  func.func @transform_4(%arg0: i32) -> (i32, i32) {
    %c0_i32 = arith.constant 0 : i32
    %c0_i32_0 = arith.constant 0 : i32
    return %arg0, %c0_i32 : i32, i32
  }
}

module attributes {stable_mosaic.version = 11 : i64} {
  func.func @kernel(%arg0: i32, %arg1: memref<256x36xbf16, #tpu.memory_space<vmem>>, %arg2: memref<36x4xbf16, #tpu.memory_space<vmem>>, %arg3: memref<1x4xf32, #tpu.memory_space<vmem>>, %arg4: memref<1x4xf32, #tpu.memory_space<vmem>>, %arg5: memref<256x4xf32, #tpu.memory_space<vmem>>, %arg6: memref<256x4xf32, #tpu.memory_space<vmem>>) attributes {dimension_semantics = [#tpu.dimension_semantics<parallel>], iteration_bounds = array<i64: 2>, scalar_prefetch = 0 : i64, scratch_operands = 0 : i64, tpu.core_type = #tpu.core_type<tc>, window_params = [{transform_indices = @transform_0, window_bounds = array<i64: 256, 36>}, {pipeline_mode = #tpu.pipeline_mode<synchronous>, transform_indices = @transform_1, window_bounds = array<i64: 36, 4>}, {pipeline_mode = #tpu.pipeline_mode<synchronous>, transform_indices = @transform_2, window_bounds = array<i64: 1, 4>}, {pipeline_mode = #tpu.pipeline_mode<synchronous>, transform_indices = @transform_3, window_bounds = array<i64: 1, 4>}, {transform_indices = @transform_4, window_bounds = array<i64: 256, 4>}, {transform_indices = @transform_5, window_bounds = array<i64: 256, 4>}]} {
    %c0 = arith.constant 0 : index
    %c0_0 = arith.constant 0 : index
    %0 = vector.load %arg1[%c0, %c0_0] : memref<256x36xbf16, #tpu.memory_space<vmem>>, vector<256x36xbf16>
    %c0_1 = arith.constant 0 : index
    %c0_2 = arith.constant 0 : index
    %1 = vector.load %arg2[%c0_1, %c0_2] : memref<36x4xbf16, #tpu.memory_space<vmem>>, vector<36x4xbf16>
    %cst = arith.constant dense<0.000000e+00> : vector<256x4xf32>
    %2 = tpu.matmul %0, %1, %cst {dimension_numbers = #tpu.dot_dimension_numbers<[1], [0], [0], [1], [0, 0, 1, 1], [], []>} : vector<256x36xbf16>, vector<36x4xbf16>, vector<256x4xf32> -> vector<256x4xf32>
    %c0_3 = arith.constant 0 : index
    %c0_4 = arith.constant 0 : index
    %3 = vector.load %arg3[%c0_3, %c0_4] : memref<1x4xf32, #tpu.memory_space<vmem>>, vector<1x4xf32>
    %4 = vector.broadcast %3 : vector<1x4xf32> to vector<256x4xf32>
    %5 = arith.mulf %2, %4 : vector<256x4xf32>
    %c0_5 = arith.constant 0 : index
    %c0_6 = arith.constant 0 : index
    %6 = vector.load %arg4[%c0_5, %c0_6] : memref<1x4xf32, #tpu.memory_space<vmem>>, vector<1x4xf32>
    %7 = vector.broadcast %6 : vector<1x4xf32> to vector<256x4xf32>
    %8 = arith.addf %5, %7 : vector<256x4xf32>
    %c0_7 = arith.constant 0 : index
    %c0_8 = arith.constant 0 : index
    %9 = vector.load %arg5[%c0_7, %c0_8] : memref<256x4xf32, #tpu.memory_space<vmem>>, vector<256x4xf32>
    %10 = arith.addf %8, %9 : vector<256x4xf32>
    %cst_9 = arith.constant 0.000000e+00 : f32
    %11 = vector.broadcast %cst_9 : f32 to vector<256x4xf32>
    %12 = arith.maximumf %10, %11 : vector<256x4xf32>
    %c0_10 = arith.constant 0 : index
    %c0_11 = arith.constant 0 : index
    %13 = vector.load %arg6[%c0_10, %c0_11] : memref<256x4xf32, #tpu.memory_space<vmem>>, vector<256x4xf32>
    tpu.vector_store %arg6[%c0_10, %c0_11], %12 {strides = array<i32>} : memref<256x4xf32, #tpu.memory_space<vmem>>, vector<256x4xf32>,
    return
  }
  func.func @transform_0(%arg0: i32) -> (i32, i32) {
    %c0_i32 = arith.constant 0 : i32
    %c0_i32_0 = arith.constant 0 : i32
    return %arg0, %c0_i32 : i32, i32
  }
  func.func @transform_1(%arg0: i32) -> (i32, i32) {
    %c0_i32 = arith.constant 0 : i32
    %c0_i32_0 = arith.constant 0 : i32
    %c0_i32_1 = arith.constant 0 : i32
    return %c0_i32, %c0_i32_0 : i32, i32
  }
  func.func @transform_2(%arg0: i32) -> (i32, i32) {
    %c0_i32 = arith.constant 0 : i32
    %c0_i32_0 = arith.constant 0 : i32
    %c0_i32_1 = arith.constant 0 : i32
    return %c0_i32, %c0_i32_0 : i32, i32
  }
  func.func @transform_3(%arg0: i32) -> (i32, i32) {
    %c0_i32 = arith.constant 0 : i32
    %c0_i32_0 = arith.constant 0 : i32
    %c0_i32_1 = arith.constant 0 : i32
    return %c0_i32, %c0_i32_0 : i32, i32
  }
  func.func @transform_4(%arg0: i32) -> (i32, i32) {
    %c0_i32 = arith.constant 0 : i32
    %c0_i32_0 = arith.constant 0 : i32
    return %arg0, %c0_i32 : i32, i32
  }
  func.func @transform_5(%arg0: i32) -> (i32, i32) {
    %c0_i32 = arith.constant 0 : i32
    %c0_i32_0 = arith.constant 0 : i32
    return %arg0, %c0_i32 : i32, i32
  }
}

</mosaic_0001>

<llo_original>
// kernel: basic_block_forward.2
$region0: #{basic_block_forward.2}
  #allocation0 [shape = 'u32[]', space=smem, size = 0x4, offset = 0x4, fixed_abs, tag = 'smem constant byte address 0x4 - core index']
  #allocation1 [shape = 'u32[144,128]{1,0:T(1,128)}', space=vmem, size = 0x12000, scoped, tag = 'internal scratch']
  %s0 = inlined_call_operand.vmem [shape: bf16[512,36], index: 0, kind: input, shape index: {}]
  %s1 = inlined_call_operand.vmem [shape: bf16[36,4], index: 1, kind: input, shape index: {}]
  %s2 = inlined_call_operand.vmem [shape: f32[1,4], index: 2, kind: input, shape index: {}]
  %s3 = inlined_call_operand.vmem [shape: f32[1,4], index: 3, kind: input, shape index: {}]
  %s4 = inlined_call_operand.vmem [shape: f32[512,4], index: 4, kind: output, shape index: {}]
  %s5 = sld [smem:[#allocation0]]
  $region49: #{basic_block_forward.2} parent=0
    _
  %s7 = ssub.s32 1, %s5
  %s8 = scalar_select 0, %s7, %s5
  loop: start=0, step=1, limit=4
  $region2: #{basic_block_forward.2} parent=0 // loop_pre_header
    _
  $region3: #{basic_block_forward.2} parent=0 // loop_header
    %s10 = sphi 0, %s14
    %p11 = scmp.ge.s32.totalorder %s10, 4
    %s20 = sphi 0, %s22
    %s23 = sphi 0, %s20
    %s24 = sphi 0, %s23
    %s40 = sphi 0, %s24
    %s44 = sphi 0, %s44
    %s46 = sphi 0, %s44
    %s47 = sphi 0, %s46
    %s61 = sphi 0, %s47
    %s65 = sphi 0, %s65
    %s67 = sphi 0, %s65
    %s68 = sphi 0, %s67
    %s82 = sphi 0, %s68
    %s86 = sphi 0, %s86
    %s88 = sphi 0, %s86
    %s89 = sphi 0, %s88
    %s103 = sphi 0, %s89
    %s109 = sphi 0, %s111
    %s112 = sphi 0, %s109
    %s113 = sphi 0, %s112
    %s129 = sphi 0, %s113
  $region4: #{basic_block_forward.2} parent=0 // loop_header_branch
    %13 = sbr.rel (%p11) target = $region8
  $region5: #{basic_block_forward.2} parent=0 // loop_body
    %s15 = ssub.s32 %s10, 1
    %s16 = ssub.s32 %s10, 2
    %s17 = sadd.s32 %s10, 1
    %s18 = ssub.s32 %s10, %s17
    %p19 = scmp.eq.s32.totalorder %s18, 0
    %s21 = sadd.s32 %s20, 1
    %s22 = scalar_select %p19, %s20, %s21
    %p25 = pneg %p19
    %p26 = scmp.eq.s32.totalorder %s10, 1
    %p27 = por %p25, %p26
    %p28 = scmp.ne.s32.totalorder %s20, %s23
    %p29 = scmp.eq.s32.totalorder %s10, 0
    %p30 = por %p28, %p29
    %p31 = scmp.ne.s32.totalorder %s20, %s23
    %p32 = scmp.eq.s32.totalorder %s15, 1
    %p33 = por %p31, %p32
    %p34 = scmp.ne.s32.totalorder %s23, %s24
    %p35 = scmp.eq.s32.totalorder %s15, 0
    %p36 = por %p34, %p35
    %p37 = scmp.ne.s32.totalorder %s23, %s24
    %p38 = scmp.eq.s32.totalorder %s16, 1
    %p39 = por %p37, %p38
    %p41 = scmp.ne.s32.totalorder %s24, %s40
    %p42 = scmp.eq.s32.totalorder %s16, 0
    %p43 = por %p41, %p42
    %s45 = sadd.s32 %s44, 1
    %p48 = scmp.eq.s32.totalorder %s10, 1
    %p49 = scmp.ne.s32.totalorder %s44, %s46
    %p50 = scmp.eq.s32.totalorder %s10, 0
    %p51 = por %p49, %p50
    %p52 = scmp.ne.s32.totalorder %s44, %s46
    %p53 = scmp.eq.s32.totalorder %s15, 1
    %p54 = por %p52, %p53
    %p55 = scmp.ne.s32.totalorder %s46, %s47
    %p56 = scmp.eq.s32.totalorder %s15, 0
    %p57 = por %p55, %p56
    %p58 = scmp.ne.s32.totalorder %s46, %s47
    %p59 = scmp.eq.s32.totalorder %s16, 1
    %p60 = por %p58, %p59
    %p62 = scmp.ne.s32.totalorder %s47, %s61
    %p63 = scmp.eq.s32.totalorder %s16, 0
    %p64 = por %p62, %p63
    %s66 = sadd.s32 %s65, 1
    %p69 = scmp.eq.s32.totalorder %s10, 1
    %p70 = scmp.ne.s32.totalorder %s65, %s67
    %p71 = scmp.eq.s32.totalorder %s10, 0
    %p72 = por %p70, %p71
    %p73 = scmp.ne.s32.totalorder %s65, %s67
    %p74 = scmp.eq.s32.totalorder %s15, 1
    %p75 = por %p73, %p74
    %p76 = scmp.ne.s32.totalorder %s67, %s68
    %p77 = scmp.eq.s32.totalorder %s15, 0
    %p78 = por %p76, %p77
    %p79 = scmp.ne.s32.totalorder %s67, %s68
    %p80 = scmp.eq.s32.totalorder %s16, 1
    %p81 = por %p79, %p80
    %p83 = scmp.ne.s32.totalorder %s68, %s82
    %p84 = scmp.eq.s32.totalorder %s16, 0
    %p85 = por %p83, %p84
    %s87 = sadd.s32 %s86, 1
    %p90 = scmp.eq.s32.totalorder %s10, 1
    %p91 = scmp.ne.s32.totalorder %s86, %s88
    %p92 = scmp.eq.s32.totalorder %s10, 0
    %p93 = por %p91, %p92
    %p94 = scmp.ne.s32.totalorder %s86, %s88
    %p95 = scmp.eq.s32.totalorder %s15, 1
    %p96 = por %p94, %p95
    %p97 = scmp.ne.s32.totalorder %s88, %s89
    %p98 = scmp.eq.s32.totalorder %s15, 0
    %p99 = por %p97, %p98
    %p100 = scmp.ne.s32.totalorder %s88, %s89
    %p101 = scmp.eq.s32.totalorder %s16, 1
    %p102 = por %p100, %p101
    %p104 = scmp.ne.s32.totalorder %s89, %s103
    %p105 = scmp.eq.s32.totalorder %s16, 0
    %p106 = por %p104, %p105
    %s107 = ssub.s32 %s10, %s17
    %p108 = scmp.eq.s32.totalorder %s107, 0
    %s110 = sadd.s32 %s109, 1
    %s111 = scalar_select %p108, %s109, %s110
    %p114 = pneg %p108
    %p115 = scmp.eq.s32.totalorder %s10, 1
    %p116 = por %p114, %p115
    %p117 = scmp.ne.s32.totalorder %s109, %s112
    %p118 = scmp.eq.s32.totalorder %s10, 0
    %p119 = por %p117, %p118
    %p120 = scmp.ne.s32.totalorder %s109, %s112
    %p121 = scmp.eq.s32.totalorder %s15, 1
    %p122 = por %p120, %p121
    %p123 = scmp.ne.s32.totalorder %s112, %s113
    %p124 = scmp.eq.s32.totalorder %s15, 0
    %p125 = por %p123, %p124
    %p126 = scmp.ne.s32.totalorder %s112, %s113
    %p127 = scmp.eq.s32.totalorder %s16, 1
    %p128 = por %p126, %p127
    %p130 = scmp.ne.s32.totalorder %s113, %s129
    %p131 = scmp.eq.s32.totalorder %s16, 0
    %p132 = por %p130, %p131
    %p133 = scmp.le.s32.totalorder 1, %s10
    %p134 = scmp.lt.s32.totalorder %s10, 3
    %p135 = pnand %p133, %p134
    %p136 = pneg %p135
    // Predicated region
    $region9: #{basic_block_forward.2} parent=5 // pred_check
      _
    $region10: #{basic_block_forward.2} parent=5 // pred_check_branch
      %138 = sbr.rel (%p135) target = $region12
    $region11: #{basic_block_forward.2} parent=5 // pred_region
      %s139 = ssub.s32 %s10, 1
      // Predicated region
      $region13: #{basic_block_forward.2} parent=11 // pred_check
        %p140 = pneg %p57
      $region14: #{basic_block_forward.2} parent=11 // pred_check_branch
        %142 = sbr.rel (%p140) target = $region16
      $region15: #{basic_block_forward.2} parent=11 // pred_region
        _
      $region16: #{basic_block_forward.2} parent=11 // pred_fallthru
        _
      // Predicated region
      $region17: #{basic_block_forward.2} parent=11 // pred_check
        %p143 = pneg %p78
      $region18: #{basic_block_forward.2} parent=11 // pred_check_branch
        %145 = sbr.rel (%p143) target = $region20
      $region19: #{basic_block_forward.2} parent=11 // pred_region
        _
      $region20: #{basic_block_forward.2} parent=11 // pred_fallthru
        _
      // Predicated region
      $region21: #{basic_block_forward.2} parent=11 // pred_check
        %p146 = pneg %p99
      $region22: #{basic_block_forward.2} parent=11 // pred_check_branch
        %148 = sbr.rel (%p146) target = $region24
      $region23: #{basic_block_forward.2} parent=11 // pred_region
        _
      $region24: #{basic_block_forward.2} parent=11 // pred_fallthru
        _
    $region12: #{basic_block_forward.2} parent=5 // pred_fallthru
      _
    %p149 = scmp.lt.s32.totalorder %s10, 2
    // Predicated region
    $region25: #{basic_block_forward.2} parent=5 // pred_check
      %p150 = pneg %p149
    $region26: #{basic_block_forward.2} parent=5 // pred_check_branch
      %152 = sbr.rel (%p150) target = $region28
    $region27: #{basic_block_forward.2} parent=5 // pred_region
      // Predicated region
      $region29: #{basic_block_forward.2} parent=27 // pred_check
        %p153 = pneg %p30
      $region30: #{basic_block_forward.2} parent=27 // pred_check_branch
        %155 = sbr.rel (%p153) target = $region32
      $region31: #{basic_block_forward.2} parent=27 // pred_region
        %s156 = smul.u32 32, %s10
        %p157 = scmp.lt.s32.totalorder %s156, 63
        %s158 = scalar_select %p157, %s156, 63
        %s159 = smul.addr %s158, 4
        %s160 = scalar_lea.vmem %s0, %s159
        %s161 = smul.u32 32, %s10
      $region32: #{basic_block_forward.2} parent=27 // pred_fallthru
        _
    $region28: #{basic_block_forward.2} parent=5 // pred_fallthru
      _
    %p162 = scmp.le.s32.totalorder 1, %s10
    %p163 = scmp.lt.s32.totalorder %s10, 3
    %p164 = pnand %p162, %p163
    %p165 = pneg %p164
    // Predicated region
    $region33: #{basic_block_forward.2} parent=5 // pred_check
      _
    $region34: #{basic_block_forward.2} parent=5 // pred_check_branch
      %167 = sbr.rel (%p164) target = $region36
    $region35: #{basic_block_forward.2} parent=5 // pred_region
      %s168 = ssub.s32 %s10, 1
      %s169 = smul.u32 32, %s15
      %p170 = scmp.lt.s32.totalorder %s169, 63
      %s171 = scalar_select %p170, %s169, 63
      %s172 = smul.addr %s171, 4
      %s173 = scalar_lea.vmem %s0, %s172
      %p174 = pneg %p36
      %p175 = pneg %p33
      %p176 = pneg %p57
      %p177 = pneg %p54
      %p178 = pneg %p78
      %p179 = pneg %p75
      %p180 = pneg %p99
      %p181 = pneg %p96
      %p182 = pneg %p125
      %p183 = pneg %p122
      %s184 = smul.u32 32, %s15
      %p185 = scmp.lt.s32.totalorder %s184, 63
      %s186 = scalar_select %p185, %s184, 63
      %s187 = smul.addr %s186, 8
      %s188 = scalar_lea.vmem %s4, %s187
      %s189 = smul.u32 32, %s15
      %p190 = scmp.lt.s32.totalorder %s189, 63
      %s191 = scalar_select %p190, %s189, 63
      %s192 = smul.addr %s191, 4
      %s193 = scalar_lea.vmem %s0, %s192
      %s194 = smul.u32 32, %s15
      %s195 = smul.u32 32, %s15
      %p196 = scmp.lt.s32.totalorder %s195, 63
      %s197 = scalar_select %p196, %s195, 63
      %s198 = smul.addr %s197, 8
      %s199 = scalar_lea.vmem %s4, %s198
      %s200 = smul.u32 32, %s15
      %v202 = vld [vmem:[%s193] sm:$0xf]
      %v203 = vld [vmem:[%s193 + $0x4] sm:$0xf]
      %v204 = vld [vmem:[%s193 + $0x8] sm:$0xf]
      %v205 = vld [vmem:[%s193 + $0xc] sm:$0xf]
      %v206 = vld [vmem:[%s193 + $0x10] sm:$0xf]
      %v207 = vld [vmem:[%s193 + $0x14] sm:$0xf]
      %v208 = vld [vmem:[%s193 + $0x18] sm:$0xf]
      %v209 = vld [vmem:[%s193 + $0x1c] sm:$0xf]
      %v210 = vld [vmem:[%s193 + $0x20] sm:$0xf]
      %v211 = vld [vmem:[%s193 + $0x24] sm:$0xf]
      %v212 = vld [vmem:[%s193 + $0x28] sm:$0xf]
      %v213 = vld [vmem:[%s193 + $0x2c] sm:$0xf]
      %v214 = vld [vmem:[%s193 + $0x30] sm:$0xf]
      %v215 = vld [vmem:[%s193 + $0x34] sm:$0xf]
      %v216 = vld [vmem:[%s193 + $0x38] sm:$0xf]
      %v217 = vld [vmem:[%s193 + $0x3c] sm:$0xf]
      %v218 = vld [vmem:[%s193 + $0x40] sm:$0xf]
      %v219 = vld [vmem:[%s193 + $0x44] sm:$0xf]
      %v220 = vld [vmem:[%s193 + $0x48] sm:$0xf]
      %v221 = vld [vmem:[%s193 + $0x4c] sm:$0xf]
      %v222 = vld [vmem:[%s193 + $0x50] sm:$0xf]
      %v223 = vld [vmem:[%s193 + $0x54] sm:$0xf]
      %v224 = vld [vmem:[%s193 + $0x58] sm:$0xf]
      %v225 = vld [vmem:[%s193 + $0x5c] sm:$0xf]
      %v226 = vld [vmem:[%s193 + $0x60] sm:$0xf]
      %v227 = vld [vmem:[%s193 + $0x64] sm:$0xf]
      %v228 = vld [vmem:[%s193 + $0x68] sm:$0xf]
      %v229 = vld [vmem:[%s193 + $0x6c] sm:$0xf]
      %v230 = vld [vmem:[%s193 + $0x70] sm:$0xf]
      %v231 = vld [vmem:[%s193 + $0x74] sm:$0xf]
      %v232 = vld [vmem:[%s193 + $0x78] sm:$0xf]
      %v233 = vld [vmem:[%s193 + $0x7c] sm:$0xf]
      %v234 = vld [vmem:[%s1] sm:$0xf]
      %v235 = vld [vmem:[%s1 + $0x4] sm:$0xf]
      %v236 = vld [vmem:[%s1 + $0x8] sm:$0xf]
      %v237 = vld [vmem:[%s1 + $0xc] sm:$0xf]
      %v238 = vld [vmem:[%s1 + $0x10] sm:$0x3]
      %v271 = vunpack.c.l.b16 %v202
      %v272 = vunpack.c.l.b16 %v203
      %v273 = vunpack.c.l.b16 %v204
      %v274 = vunpack.c.l.b16 %v205
      %v275 = vunpack.c.l.b16 %v206
      %v276 = vunpack.c.l.b16 %v207
      %v277 = vunpack.c.l.b16 %v208
      %v278 = vunpack.c.l.b16 %v209
      %v279 = vunpack.c.l.b16 %v210
      %v280 = vunpack.c.l.b16 %v211
      %v281 = vunpack.c.l.b16 %v212
      %v282 = vunpack.c.l.b16 %v213
      %v283 = vunpack.c.l.b16 %v214
      %v284 = vunpack.c.l.b16 %v215
      %v285 = vunpack.c.l.b16 %v216
      %v286 = vunpack.c.l.b16 %v217
      %v287 = vunpack.c.l.b16 %v218
      %v288 = vunpack.c.l.b16 %v219
      %v289 = vunpack.c.l.b16 %v220
      %v290 = vunpack.c.l.b16 %v221
      %v291 = vunpack.c.l.b16 %v222
      %v292 = vunpack.c.l.b16 %v223
      %v293 = vunpack.c.l.b16 %v224
      %v294 = vunpack.c.l.b16 %v225
      %v295 = vunpack.c.l.b16 %v226
      %v296 = vunpack.c.l.b16 %v227
      %v297 = vunpack.c.l.b16 %v228
      %v298 = vunpack.c.l.b16 %v229
      %v299 = vunpack.c.l.b16 %v230
      %v300 = vunpack.c.l.b16 %v231
      %v301 = vunpack.c.l.b16 %v232
      %v302 = vunpack.c.l.b16 %v233
      %v303 = vpack.c.b16 %v272, %v271
      %v304 = vpack.c.b16 %v274, %v273
      %v305 = vpack.c.b16 %v276, %v275
      %v306 = vpack.c.b16 %v278, %v277
      %v307 = vpack.c.b16 %v280, %v279
      %v308 = vpack.c.b16 %v282, %v281
      %v309 = vpack.c.b16 %v284, %v283
      %v310 = vpack.c.b16 %v286, %v285
      %v311 = vpack.c.b16 %v288, %v287
      %v312 = vpack.c.b16 %v290, %v289
      %v313 = vpack.c.b16 %v292, %v291
      %v314 = vpack.c.b16 %v294, %v293
      %v315 = vpack.c.b16 %v296, %v295
      %v316 = vpack.c.b16 %v298, %v297
      %v317 = vpack.c.b16 %v300, %v299
      %v318 = vpack.c.b16 %v302, %v301
      %v324 = vunpack.c.l.b16 %v234
      %v325 = vunpack.c.l.b16 %v235
      %v326 = vunpack.c.l.b16 %v236
      %v327 = vunpack.c.l.b16 %v237
      %v328 = vunpack.c.l.b16 %v238
      %v329 = vpack.c.b16 %v325, %v324
      %v330 = vpack.c.b16 %v327, %v326
      %v331 = vpack.c.b16 %v328, %v328
      %vm334 = vcmask 293888
      %v336 = vsel %vm334, %v303, 0
      %v339 = vsel %vm334, %v304, 0
      %v342 = vsel %vm334, %v305, 0
      %v345 = vsel %vm334, %v306, 0
      %v348 = vsel %vm334, %v307, 0
      %v351 = vsel %vm334, %v308, 0
      %v354 = vsel %vm334, %v309, 0
      %v357 = vsel %vm334, %v310, 0
      %v360 = vsel %vm334, %v311, 0
      %v363 = vsel %vm334, %v312, 0
      %v366 = vsel %vm334, %v313, 0
      %v369 = vsel %vm334, %v314, 0
      %v372 = vsel %vm334, %v315, 0
      %v375 = vsel %vm334, %v316, 0
      %v378 = vsel %vm334, %v317, 0
      %v381 = vsel %vm334, %v318, 0
      %vm383 = vcmask 1041408
      %v385 = vsel %vm383, %v331, 0
      %387 = vmatprep.subr.bf16.mxu0 0
      %388 = vmatpush1.bf16.msra.mxu0 %v329
      %389 = vmatprep.subr.bf16.mxu0 0
      %390 = vmatpush1.bf16.msra.mxu0 %v330
      %391 = vmatprep.subr.bf16.mxu0 0
      %392 = vmatpush1.bf16.msra.mxu0 %v385
      %393 = vmatprep.subr.bf16.mxu0 0
      %394 = vmatpush1.bf16.msra.mxu0 0
      %395 = vmatprep.subr.bf16.mxu0 0
      %396 = vmatpush1.bf16.msra.mxu0 0
      %397 = vmatprep.subr.bf16.mxu0 0
      %398 = vmatpush1.bf16.msra.mxu0 0
      %399 = vmatprep.subr.bf16.mxu0 0
      %400 = vmatpush1.bf16.msra.mxu0 0
      %401 = vmatprep.subr.bf16.mxu0 0
      %402 = vmatpush1.bf16.msra.mxu0 0
      %403 = vmatprep.subr.bf16.mxu0 0
      %404 = vmatpush1.bf16.msra.mxu0 0
      %405 = vmatprep.subr.bf16.mxu0 0
      %406 = vmatpush1.bf16.msra.mxu0 0
      %407 = vmatprep.subr.bf16.mxu0 0
      %408 = vmatpush1.bf16.msra.mxu0 0
      %409 = vmatprep.subr.bf16.mxu0 0
      %410 = vmatpush1.bf16.msra.mxu0 0
      %411 = vmatprep.subr.bf16.mxu0 0
      %412 = vmatpush1.bf16.msra.mxu0 0
      %413 = vmatprep.subr.bf16.mxu0 0
      %414 = vmatpush1.bf16.msra.mxu0 0
      %415 = vmatprep.subr.bf16.mxu0 0
      %416 = vmatpush1.bf16.msra.mxu0 0
      %417 = vmatprep.subr.bf16.mxu0 0
      %418 = vmatpush1.bf16.msra.mxu0 0
      %419 = vmatprep.mubr.bf16.mxu0 0
      %420 = vmatmul.mubr.bf16.gmra.mrb[0].mxu0 %v336
      %v421 = vpop.f32.mrb[0].mxu0
      %v422 = vadd.f32 0.0, %v421
      %v423 = vpop.f32.mrb[0].mxu0
      %v424 = vpop.f32.mrb[0].mxu0
      %v425 = vadd.f32 0.0, %v424
      %v426 = vpop.f32.mrb[0].mxu0
      %427 = vmatprep.mubr.bf16.mxu0 0
      %428 = vmatmul.mubr.bf16.gmra.mrb[0].mxu0 %v339
      %v429 = vpop.f32.mrb[0].mxu0
      %v430 = vadd.f32 0.0, %v429
      %v431 = vpop.f32.mrb[0].mxu0
      %v432 = vpop.f32.mrb[0].mxu0
      %v433 = vadd.f32 0.0, %v432
      %v434 = vpop.f32.mrb[0].mxu0
      %435 = vmatprep.mubr.bf16.mxu0 0
      %436 = vmatmul.mubr.bf16.gmra.mrb[0].mxu0 %v342
      %v437 = vpop.f32.mrb[0].mxu0
      %v438 = vadd.f32 0.0, %v437
      %v439 = vpop.f32.mrb[0].mxu0
      %v440 = vpop.f32.mrb[0].mxu0
      %v441 = vadd.f32 0.0, %v440
      %v442 = vpop.f32.mrb[0].mxu0
      %443 = vmatprep.mubr.bf16.mxu0 0
      %444 = vmatmul.mubr.bf16.gmra.mrb[0].mxu0 %v345
      %v445 = vpop.f32.mrb[0].mxu0
      %v446 = vadd.f32 0.0, %v445
      %v447 = vpop.f32.mrb[0].mxu0
      %v448 = vpop.f32.mrb[0].mxu0
      %v449 = vadd.f32 0.0, %v448
      %v450 = vpop.f32.mrb[0].mxu0
      %451 = vmatprep.mubr.bf16.mxu0 0
      %452 = vmatmul.mubr.bf16.gmra.mrb[0].mxu0 %v348
      %v453 = vpop.f32.mrb[0].mxu0
      %v454 = vadd.f32 0.0, %v453
      %v455 = vpop.f32.mrb[0].mxu0
      %v456 = vpop.f32.mrb[0].mxu0
      %v457 = vadd.f32 0.0, %v456
      %v458 = vpop.f32.mrb[0].mxu0
      %459 = vmatprep.mubr.bf16.mxu0 0
      %460 = vmatmul.mubr.bf16.gmra.mrb[0].mxu0 %v351
      %v461 = vpop.f32.mrb[0].mxu0
      %v462 = vadd.f32 0.0, %v461
      %v463 = vpop.f32.mrb[0].mxu0
      %v464 = vpop.f32.mrb[0].mxu0
      %v465 = vadd.f32 0.0, %v464
      %v466 = vpop.f32.mrb[0].mxu0
      %467 = vmatprep.mubr.bf16.mxu0 0
      %468 = vmatmul.mubr.bf16.gmra.mrb[0].mxu0 %v354
      %v469 = vpop.f32.mrb[0].mxu0
      %v470 = vadd.f32 0.0, %v469
      %v471 = vpop.f32.mrb[0].mxu0
      %v472 = vpop.f32.mrb[0].mxu0
      %v473 = vadd.f32 0.0, %v472
      %v474 = vpop.f32.mrb[0].mxu0
      %475 = vmatprep.mubr.bf16.mxu0 0
      %476 = vmatmul.mubr.bf16.gmra.mrb[0].mxu0 %v357
      %v477 = vpop.f32.mrb[0].mxu0
      %v478 = vadd.f32 0.0, %v477
      %v479 = vpop.f32.mrb[0].mxu0
      %v480 = vpop.f32.mrb[0].mxu0
      %v481 = vadd.f32 0.0, %v480
      %v482 = vpop.f32.mrb[0].mxu0
      %483 = vmatprep.mubr.bf16.mxu0 0
      %484 = vmatmul.mubr.bf16.gmra.mrb[0].mxu0 %v360
      %v485 = vpop.f32.mrb[0].mxu0
      %v486 = vadd.f32 0.0, %v485
      %v487 = vpop.f32.mrb[0].mxu0
      %v488 = vpop.f32.mrb[0].mxu0
      %v489 = vadd.f32 0.0, %v488
      %v490 = vpop.f32.mrb[0].mxu0
      %491 = vmatprep.mubr.bf16.mxu0 0
      %492 = vmatmul.mubr.bf16.gmra.mrb[0].mxu0 %v363
      %v493 = vpop.f32.mrb[0].mxu0
      %v494 = vadd.f32 0.0, %v493
      %v495 = vpop.f32.mrb[0].mxu0
      %v496 = vpop.f32.mrb[0].mxu0
      %v497 = vadd.f32 0.0, %v496
      %v498 = vpop.f32.mrb[0].mxu0
      %499 = vmatprep.mubr.bf16.mxu0 0
      %500 = vmatmul.mubr.bf16.gmra.mrb[0].mxu0 %v366
      %v501 = vpop.f32.mrb[0].mxu0
      %v502 = vadd.f32 0.0, %v501
      %v503 = vpop.f32.mrb[0].mxu0
      %v504 = vpop.f32.mrb[0].mxu0
      %v505 = vadd.f32 0.0, %v504
      %v506 = vpop.f32.mrb[0].mxu0
      %507 = vmatprep.mubr.bf16.mxu0 0
      %508 = vmatmul.mubr.bf16.gmra.mrb[0].mxu0 %v369
      %v509 = vpop.f32.mrb[0].mxu0
      %v510 = vadd.f32 0.0, %v509
      %v511 = vpop.f32.mrb[0].mxu0
      %v512 = vpop.f32.mrb[0].mxu0
      %v513 = vadd.f32 0.0, %v512
      %v514 = vpop.f32.mrb[0].mxu0
      %515 = vmatprep.mubr.bf16.mxu0 0
      %516 = vmatmul.mubr.bf16.gmra.mrb[0].mxu0 %v372
      %v517 = vpop.f32.mrb[0].mxu0
      %v518 = vadd.f32 0.0, %v517
      %v519 = vpop.f32.mrb[0].mxu0
      %v520 = vpop.f32.mrb[0].mxu0
      %v521 = vadd.f32 0.0, %v520
      %v522 = vpop.f32.mrb[0].mxu0
      %523 = vmatprep.mubr.bf16.mxu0 0
      %524 = vmatmul.mubr.bf16.gmra.mrb[0].mxu0 %v375
      %v525 = vpop.f32.mrb[0].mxu0
      %v526 = vadd.f32 0.0, %v525
      %v527 = vpop.f32.mrb[0].mxu0
      %v528 = vpop.f32.mrb[0].mxu0
      %v529 = vadd.f32 0.0, %v528
      %v530 = vpop.f32.mrb[0].mxu0
      %531 = vmatprep.mubr.bf16.mxu0 0
      %532 = vmatmul.mubr.bf16.gmra.mrb[0].mxu0 %v378
      %v533 = vpop.f32.mrb[0].mxu0
      %v534 = vadd.f32 0.0, %v533
      %v535 = vpop.f32.mrb[0].mxu0
      %v536 = vpop.f32.mrb[0].mxu0
      %v537 = vadd.f32 0.0, %v536
      %v538 = vpop.f32.mrb[0].mxu0
      %539 = vmatprep.mubr.bf16.mxu0 0
      %540 = vmatmul.mubr.bf16.gmra.mrb[0].mxu0 %v381
      %v541 = vpop.f32.mrb[0].mxu0
      %v542 = vadd.f32 0.0, %v541
      %v543 = vpop.f32.mrb[0].mxu0
      %v544 = vpop.f32.mrb[0].mxu0
      %v545 = vadd.f32 0.0, %v544
      %v546 = vpop.f32.mrb[0].mxu0
      %547 = vdwg.mxu0
      %v548 = vmax.f32 %v422, 0.0
      %v549 = vmax.f32 %v425, 0.0
      %v550 = vmax.f32 %v430, 0.0
      %v551 = vmax.f32 %v433, 0.0
      %v552 = vmax.f32 %v438, 0.0
      %v553 = vmax.f32 %v441, 0.0
      %v554 = vmax.f32 %v446, 0.0
      %v555 = vmax.f32 %v449, 0.0
      %v556 = vmax.f32 %v454, 0.0
      %v557 = vmax.f32 %v457, 0.0
      %v558 = vmax.f32 %v462, 0.0
      %v559 = vmax.f32 %v465, 0.0
      %v560 = vmax.f32 %v470, 0.0
      %v561 = vmax.f32 %v473, 0.0
      %v562 = vmax.f32 %v478, 0.0
      %v563 = vmax.f32 %v481, 0.0
      %v564 = vmax.f32 %v486, 0.0
      %v565 = vmax.f32 %v489, 0.0
      %v566 = vmax.f32 %v494, 0.0
      %v567 = vmax.f32 %v497, 0.0
      %v568 = vmax.f32 %v502, 0.0
      %v569 = vmax.f32 %v505, 0.0
      %v570 = vmax.f32 %v510, 0.0
      %v571 = vmax.f32 %v513, 0.0
      %v572 = vmax.f32 %v518, 0.0
      %v573 = vmax.f32 %v521, 0.0
      %v574 = vmax.f32 %v526, 0.0
      %v575 = vmax.f32 %v529, 0.0
      %v576 = vmax.f32 %v534, 0.0
      %v577 = vmax.f32 %v537, 0.0
      %v578 = vmax.f32 %v542, 0.0
      %v579 = vmax.f32 %v545, 0.0
      %v580 = vld [vmem:[%s2] sm:$0x1]
      %v582 = vlaneseq
      %v583 = vshrl.u32 %v582, 7
      %v584 = vsub.s32 0, %v583
      %v585 = vrot.slane %v580, %v584
      %v587 = vmul.f32 %v548, %v585
      %v588 = vmul.f32 %v549, %v585
      %v589 = vmul.f32 %v550, %v585
      %v590 = vmul.f32 %v551, %v585
      %v591 = vmul.f32 %v552, %v585
      %v592 = vmul.f32 %v553, %v585
      %v593 = vmul.f32 %v554, %v585
      %v594 = vmul.f32 %v555, %v585
      %v595 = vmul.f32 %v556, %v585
      %v596 = vmul.f32 %v557, %v585
      %v597 = vmul.f32 %v558, %v585
      %v598 = vmul.f32 %v559, %v585
      %v599 = vmul.f32 %v560, %v585
      %v600 = vmul.f32 %v561, %v585
      %v601 = vmul.f32 %v562, %v585
      %v602 = vmul.f32 %v563, %v585
      %v603 = vmul.f32 %v564, %v585
      %v604 = vmul.f32 %v565, %v585
      %v605 = vmul.f32 %v566, %v585
      %v606 = vmul.f32 %v567, %v585
      %v607 = vmul.f32 %v568, %v585
      %v608 = vmul.f32 %v569, %v585
      %v609 = vmul.f32 %v570, %v585
      %v610 = vmul.f32 %v571, %v585
      %v611 = vmul.f32 %v572, %v585
      %v612 = vmul.f32 %v573, %v585
      %v613 = vmul.f32 %v574, %v585
      %v614 = vmul.f32 %v575, %v585
      %v615 = vmul.f32 %v576, %v585
      %v616 = vmul.f32 %v577, %v585
      %v617 = vmul.f32 %v578, %v585
      %v618 = vmul.f32 %v579, %v585
      %v619 = vld [vmem:[%s3] sm:$0x1]
      %v621 = vlaneseq
      %v622 = vshrl.u32 %v621, 7
      %v623 = vsub.s32 0, %v622
      %v624 = vrot.slane %v619, %v623
      %v626 = vadd.f32 %v587, %v624
      %v627 = vadd.f32 %v588, %v624
      %v628 = vadd.f32 %v589, %v624
      %v629 = vadd.f32 %v590, %v624
      %v630 = vadd.f32 %v591, %v624
      %v631 = vadd.f32 %v592, %v624
      %v632 = vadd.f32 %v593, %v624
      %v633 = vadd.f32 %v594, %v624
      %v634 = vadd.f32 %v595, %v624
      %v635 = vadd.f32 %v596, %v624
      %v636 = vadd.f32 %v597, %v624
      %v637 = vadd.f32 %v598, %v624
      %v638 = vadd.f32 %v599, %v624
      %v639 = vadd.f32 %v600, %v624
      %v640 = vadd.f32 %v601, %v624
      %v641 = vadd.f32 %v602, %v624
      %v642 = vadd.f32 %v603, %v624
      %v643 = vadd.f32 %v604, %v624
      %v644 = vadd.f32 %v605, %v624
      %v645 = vadd.f32 %v606, %v624
      %v646 = vadd.f32 %v607, %v624
      %v647 = vadd.f32 %v608, %v624
      %v648 = vadd.f32 %v609, %v624
      %v649 = vadd.f32 %v610, %v624
      %v650 = vadd.f32 %v611, %v624
      %v651 = vadd.f32 %v612, %v624
      %v652 = vadd.f32 %v613, %v624
      %v653 = vadd.f32 %v614, %v624
      %v654 = vadd.f32 %v615, %v624
      %v655 = vadd.f32 %v616, %v624
      %v656 = vadd.f32 %v617, %v624
      %v657 = vadd.f32 %v618, %v624
      %vm658 = vcmask 31744
      %659 = vst.msk [vmem:[%s199] sm:$0xff] %vm658, %v626
      %660 = vst.msk [vmem:[%s199 + $0x8] sm:$0xff] %vm658, %v627
      %661 = vst.msk [vmem:[%s199 + $0x10] sm:$0xff] %vm658, %v628
      %662 = vst.msk [vmem:[%s199 + $0x18] sm:$0xff] %vm658, %v629
      %663 = vst.msk [vmem:[%s199 + $0x20] sm:$0xff] %vm658, %v630
      %664 = vst.msk [vmem:[%s199 + $0x28] sm:$0xff] %vm658, %v631
      %665 = vst.msk [vmem:[%s199 + $0x30] sm:$0xff] %vm658, %v632
      %666 = vst.msk [vmem:[%s199 + $0x38] sm:$0xff] %vm658, %v633
      %667 = vst.msk [vmem:[%s199 + $0x40] sm:$0xff] %vm658, %v634
      %668 = vst.msk [vmem:[%s199 + $0x48] sm:$0xff] %vm658, %v635
      %669 = vst.msk [vmem:[%s199 + $0x50] sm:$0xff] %vm658, %v636
      %670 = vst.msk [vmem:[%s199 + $0x58] sm:$0xff] %vm658, %v637
      %671 = vst.msk [vmem:[%s199 + $0x60] sm:$0xff] %vm658, %v638
      %672 = vst.msk [vmem:[%s199 + $0x68] sm:$0xff] %vm658, %v639
      %673 = vst.msk [vmem:[%s199 + $0x70] sm:$0xff] %vm658, %v640
      %674 = vst.msk [vmem:[%s199 + $0x78] sm:$0xff] %vm658, %v641
      %675 = vst.msk [vmem:[%s199 + $0x80] sm:$0xff] %vm658, %v642
      %676 = vst.msk [vmem:[%s199 + $0x88] sm:$0xff] %vm658, %v643
      %677 = vst.msk [vmem:[%s199 + $0x90] sm:$0xff] %vm658, %v644
      %678 = vst.msk [vmem:[%s199 + $0x98] sm:$0xff] %vm658, %v645
      %679 = vst.msk [vmem:[%s199 + $0xa0] sm:$0xff] %vm658, %v646
      %680 = vst.msk [vmem:[%s199 + $0xa8] sm:$0xff] %vm658, %v647
      %681 = vst.msk [vmem:[%s199 + $0xb0] sm:$0xff] %vm658, %v648
      %682 = vst.msk [vmem:[%s199 + $0xb8] sm:$0xff] %vm658, %v649
      %683 = vst.msk [vmem:[%s199 + $0xc0] sm:$0xff] %vm658, %v650
      %684 = vst.msk [vmem:[%s199 + $0xc8] sm:$0xff] %vm658, %v651
      %685 = vst.msk [vmem:[%s199 + $0xd0] sm:$0xff] %vm658, %v652
      %686 = vst.msk [vmem:[%s199 + $0xd8] sm:$0xff] %vm658, %v653
      %687 = vst.msk [vmem:[%s199 + $0xe0] sm:$0xff] %vm658, %v654
      %688 = vst.msk [vmem:[%s199 + $0xe8] sm:$0xff] %vm658, %v655
      %689 = vst.msk [vmem:[%s199 + $0xf0] sm:$0xff] %vm658, %v656
      %690 = vst.msk [vmem:[%s199 + $0xf8] sm:$0xff] %vm658, %v657
      %s691 = smul.u32 32, %s15
      %p692 = scmp.lt.s32.totalorder %s691, 63
      %s693 = scalar_select %p692, %s691, 63
      %s694 = smul.addr %s693, 8
      %s695 = scalar_lea.vmem %s4, %s694
      // Predicated region
      $region37: #{basic_block_forward.2} parent=35 // pred_check
        %p696 = pneg %p122
      $region38: #{basic_block_forward.2} parent=35 // pred_check_branch
        %698 = sbr.rel (%p696) target = $region40
      $region39: #{basic_block_forward.2} parent=35 // pred_region
        %s699 = smul.u32 32, %s15
      $region40: #{basic_block_forward.2} parent=35 // pred_fallthru
        _
    $region36: #{basic_block_forward.2} parent=5 // pred_fallthru
      _
    %p700 = scmp.le.s32.totalorder 2, %s10
    // Predicated region
    $region41: #{basic_block_forward.2} parent=5 // pred_check
      %p701 = pneg %p700
    $region42: #{basic_block_forward.2} parent=5 // pred_check_branch
      %703 = sbr.rel (%p701) target = $region44
    $region43: #{basic_block_forward.2} parent=5 // pred_region
      %s704 = ssub.s32 %s10, 2
      // Predicated region
      $region45: #{basic_block_forward.2} parent=43 // pred_check
        %p705 = pneg %p128
      $region46: #{basic_block_forward.2} parent=43 // pred_check_branch
        %707 = sbr.rel (%p705) target = $region48
      $region47: #{basic_block_forward.2} parent=43 // pred_region
        %s708 = smul.u32 32, %s16
        %p709 = scmp.lt.s32.totalorder %s708, 63
        %s710 = scalar_select %p709, %s708, 63
        %s711 = smul.addr %s710, 8
        %s712 = scalar_lea.vmem %s4, %s711
      $region48: #{basic_block_forward.2} parent=43 // pred_fallthru
        _
    $region44: #{basic_block_forward.2} parent=5 // pred_fallthru
      _
  $region6: #{basic_block_forward.2} parent=0 // loop_footer
    %s14 = sadd.s32 1, %s10
  $region7: #{basic_block_forward.2} parent=0 // loop_footer_branch
    %9 = sbr.rel target = $region3
  $region8: #{basic_block_forward.2} parent=0 // loop_exit
    _

// kernel: basic_block_forward.3
$region0: #{basic_block_forward.3}
  #allocation0 [shape = 'u32[]', space=smem, size = 0x4, offset = 0x4, fixed_abs, tag = 'smem constant byte address 0x4 - core index']
  #allocation1 [shape = 'u32[144,128]{1,0:T(1,128)}', space=vmem, size = 0x12000, scoped, tag = 'internal scratch']
  %s0 = inlined_call_operand.vmem [shape: bf16[512,36], index: 0, kind: input, shape index: {}]
  %s1 = inlined_call_operand.vmem [shape: bf16[36,4], index: 1, kind: input, shape index: {}]
  %s2 = inlined_call_operand.vmem [shape: f32[1,4], index: 2, kind: input, shape index: {}]
  %s3 = inlined_call_operand.vmem [shape: f32[1,4], index: 3, kind: input, shape index: {}]
  %s4 = inlined_call_operand.vmem [shape: f32[512,4], index: 4, kind: input, shape index: {}]
  %s5 = inlined_call_operand.vmem [shape: f32[512,4], index: 5, kind: output, shape index: {}]
  %s6 = sld [smem:[#allocation0]]
  $region53: #{basic_block_forward.3} parent=0
    _
  %s8 = ssub.s32 1, %s6
  %s9 = scalar_select 0, %s8, %s6
  loop: start=0, step=1, limit=4
  $region2: #{basic_block_forward.3} parent=0 // loop_pre_header
    _
  $region3: #{basic_block_forward.3} parent=0 // loop_header
    %s11 = sphi 0, %s15
    %p12 = scmp.ge.s32.totalorder %s11, 4
    %s21 = sphi 0, %s23
    %s24 = sphi 0, %s21
    %s25 = sphi 0, %s24
    %s41 = sphi 0, %s25
    %s45 = sphi 0, %s45
    %s47 = sphi 0, %s45
    %s48 = sphi 0, %s47
    %s62 = sphi 0, %s48
    %s66 = sphi 0, %s66
    %s68 = sphi 0, %s66
    %s69 = sphi 0, %s68
    %s83 = sphi 0, %s69
    %s87 = sphi 0, %s87
    %s89 = sphi 0, %s87
    %s90 = sphi 0, %s89
    %s104 = sphi 0, %s90
    %s110 = sphi 0, %s112
    %s113 = sphi 0, %s110
    %s114 = sphi 0, %s113
    %s130 = sphi 0, %s114
    %s136 = sphi 0, %s138
    %s139 = sphi 0, %s136
    %s140 = sphi 0, %s139
    %s156 = sphi 0, %s140
  $region4: #{basic_block_forward.3} parent=0 // loop_header_branch
    %14 = sbr.rel (%p12) target = $region8
  $region5: #{basic_block_forward.3} parent=0 // loop_body
    %s16 = ssub.s32 %s11, 1
    %s17 = ssub.s32 %s11, 2
    %s18 = sadd.s32 %s11, 1
    %s19 = ssub.s32 %s11, %s18
    %p20 = scmp.eq.s32.totalorder %s19, 0
    %s22 = sadd.s32 %s21, 1
    %s23 = scalar_select %p20, %s21, %s22
    %p26 = pneg %p20
    %p27 = scmp.eq.s32.totalorder %s11, 1
    %p28 = por %p26, %p27
    %p29 = scmp.ne.s32.totalorder %s21, %s24
    %p30 = scmp.eq.s32.totalorder %s11, 0
    %p31 = por %p29, %p30
    %p32 = scmp.ne.s32.totalorder %s21, %s24
    %p33 = scmp.eq.s32.totalorder %s16, 1
    %p34 = por %p32, %p33
    %p35 = scmp.ne.s32.totalorder %s24, %s25
    %p36 = scmp.eq.s32.totalorder %s16, 0
    %p37 = por %p35, %p36
    %p38 = scmp.ne.s32.totalorder %s24, %s25
    %p39 = scmp.eq.s32.totalorder %s17, 1
    %p40 = por %p38, %p39
    %p42 = scmp.ne.s32.totalorder %s25, %s41
    %p43 = scmp.eq.s32.totalorder %s17, 0
    %p44 = por %p42, %p43
    %s46 = sadd.s32 %s45, 1
    %p49 = scmp.eq.s32.totalorder %s11, 1
    %p50 = scmp.ne.s32.totalorder %s45, %s47
    %p51 = scmp.eq.s32.totalorder %s11, 0
    %p52 = por %p50, %p51
    %p53 = scmp.ne.s32.totalorder %s45, %s47
    %p54 = scmp.eq.s32.totalorder %s16, 1
    %p55 = por %p53, %p54
    %p56 = scmp.ne.s32.totalorder %s47, %s48
    %p57 = scmp.eq.s32.totalorder %s16, 0
    %p58 = por %p56, %p57
    %p59 = scmp.ne.s32.totalorder %s47, %s48
    %p60 = scmp.eq.s32.totalorder %s17, 1
    %p61 = por %p59, %p60
    %p63 = scmp.ne.s32.totalorder %s48, %s62
    %p64 = scmp.eq.s32.totalorder %s17, 0
    %p65 = por %p63, %p64
    %s67 = sadd.s32 %s66, 1
    %p70 = scmp.eq.s32.totalorder %s11, 1
    %p71 = scmp.ne.s32.totalorder %s66, %s68
    %p72 = scmp.eq.s32.totalorder %s11, 0
    %p73 = por %p71, %p72
    %p74 = scmp.ne.s32.totalorder %s66, %s68
    %p75 = scmp.eq.s32.totalorder %s16, 1
    %p76 = por %p74, %p75
    %p77 = scmp.ne.s32.totalorder %s68, %s69
    %p78 = scmp.eq.s32.totalorder %s16, 0
    %p79 = por %p77, %p78
    %p80 = scmp.ne.s32.totalorder %s68, %s69
    %p81 = scmp.eq.s32.totalorder %s17, 1
    %p82 = por %p80, %p81
    %p84 = scmp.ne.s32.totalorder %s69, %s83
    %p85 = scmp.eq.s32.totalorder %s17, 0
    %p86 = por %p84, %p85
    %s88 = sadd.s32 %s87, 1
    %p91 = scmp.eq.s32.totalorder %s11, 1
    %p92 = scmp.ne.s32.totalorder %s87, %s89
    %p93 = scmp.eq.s32.totalorder %s11, 0
    %p94 = por %p92, %p93
    %p95 = scmp.ne.s32.totalorder %s87, %s89
    %p96 = scmp.eq.s32.totalorder %s16, 1
    %p97 = por %p95, %p96
    %p98 = scmp.ne.s32.totalorder %s89, %s90
    %p99 = scmp.eq.s32.totalorder %s16, 0
    %p100 = por %p98, %p99
    %p101 = scmp.ne.s32.totalorder %s89, %s90
    %p102 = scmp.eq.s32.totalorder %s17, 1
    %p103 = por %p101, %p102
    %p105 = scmp.ne.s32.totalorder %s90, %s104
    %p106 = scmp.eq.s32.totalorder %s17, 0
    %p107 = por %p105, %p106
    %s108 = ssub.s32 %s11, %s18
    %p109 = scmp.eq.s32.totalorder %s108, 0
    %s111 = sadd.s32 %s110, 1
    %s112 = scalar_select %p109, %s110, %s111
    %p115 = pneg %p109
    %p116 = scmp.eq.s32.totalorder %s11, 1
    %p117 = por %p115, %p116
    %p118 = scmp.ne.s32.totalorder %s110, %s113
    %p119 = scmp.eq.s32.totalorder %s11, 0
    %p120 = por %p118, %p119
    %p121 = scmp.ne.s32.totalorder %s110, %s113
    %p122 = scmp.eq.s32.totalorder %s16, 1
    %p123 = por %p121, %p122
    %p124 = scmp.ne.s32.totalorder %s113, %s114
    %p125 = scmp.eq.s32.totalorder %s16, 0
    %p126 = por %p124, %p125
    %p127 = scmp.ne.s32.totalorder %s113, %s114
    %p128 = scmp.eq.s32.totalorder %s17, 1
    %p129 = por %p127, %p128
    %p131 = scmp.ne.s32.totalorder %s114, %s130
    %p132 = scmp.eq.s32.totalorder %s17, 0
    %p133 = por %p131, %p132
    %s134 = ssub.s32 %s11, %s18
    %p135 = scmp.eq.s32.totalorder %s134, 0
    %s137 = sadd.s32 %s136, 1
    %s138 = scalar_select %p135, %s136, %s137
    %p141 = pneg %p135
    %p142 = scmp.eq.s32.totalorder %s11, 1
    %p143 = por %p141, %p142
    %p144 = scmp.ne.s32.totalorder %s136, %s139
    %p145 = scmp.eq.s32.totalorder %s11, 0
    %p146 = por %p144, %p145
    %p147 = scmp.ne.s32.totalorder %s136, %s139
    %p148 = scmp.eq.s32.totalorder %s16, 1
    %p149 = por %p147, %p148
    %p150 = scmp.ne.s32.totalorder %s139, %s140
    %p151 = scmp.eq.s32.totalorder %s16, 0
    %p152 = por %p150, %p151
    %p153 = scmp.ne.s32.totalorder %s139, %s140
    %p154 = scmp.eq.s32.totalorder %s17, 1
    %p155 = por %p153, %p154
    %p157 = scmp.ne.s32.totalorder %s140, %s156
    %p158 = scmp.eq.s32.totalorder %s17, 0
    %p159 = por %p157, %p158
    %p160 = scmp.le.s32.totalorder 1, %s11
    %p161 = scmp.lt.s32.totalorder %s11, 3
    %p162 = pnand %p160, %p161
    %p163 = pneg %p162
    // Predicated region
    $region9: #{basic_block_forward.3} parent=5 // pred_check
      _
    $region10: #{basic_block_forward.3} parent=5 // pred_check_branch
      %165 = sbr.rel (%p162) target = $region12
    $region11: #{basic_block_forward.3} parent=5 // pred_region
      %s166 = ssub.s32 %s11, 1
      // Predicated region
      $region13: #{basic_block_forward.3} parent=11 // pred_check
        %p167 = pneg %p58
      $region14: #{basic_block_forward.3} parent=11 // pred_check_branch
        %169 = sbr.rel (%p167) target = $region16
      $region15: #{basic_block_forward.3} parent=11 // pred_region
        _
      $region16: #{basic_block_forward.3} parent=11 // pred_fallthru
        _
      // Predicated region
      $region17: #{basic_block_forward.3} parent=11 // pred_check
        %p170 = pneg %p79
      $region18: #{basic_block_forward.3} parent=11 // pred_check_branch
        %172 = sbr.rel (%p170) target = $region20
      $region19: #{basic_block_forward.3} parent=11 // pred_region
        _
      $region20: #{basic_block_forward.3} parent=11 // pred_fallthru
        _
      // Predicated region
      $region21: #{basic_block_forward.3} parent=11 // pred_check
        %p173 = pneg %p100
      $region22: #{basic_block_forward.3} parent=11 // pred_check_branch
        %175 = sbr.rel (%p173) target = $region24
      $region23: #{basic_block_forward.3} parent=11 // pred_region
        _
      $region24: #{basic_block_forward.3} parent=11 // pred_fallthru
        _
    $region12: #{basic_block_forward.3} parent=5 // pred_fallthru
      _
    %p176 = scmp.lt.s32.totalorder %s11, 2
    // Predicated region
    $region25: #{basic_block_forward.3} parent=5 // pred_check
      %p177 = pneg %p176
    $region26: #{basic_block_forward.3} parent=5 // pred_check_branch
      %179 = sbr.rel (%p177) target = $region28
    $region27: #{basic_block_forward.3} parent=5 // pred_region
      // Predicated region
      $region29: #{basic_block_forward.3} parent=27 // pred_check
        %p180 = pneg %p31
      $region30: #{basic_block_forward.3} parent=27 // pred_check_branch
        %182 = sbr.rel (%p180) target = $region32
      $region31: #{basic_block_forward.3} parent=27 // pred_region
        %s183 = smul.u32 32, %s11
        %p184 = scmp.lt.s32.totalorder %s183, 63
        %s185 = scalar_select %p184, %s183, 63
        %s186 = smul.addr %s185, 4
        %s187 = scalar_lea.vmem %s0, %s186
        %s188 = smul.u32 32, %s11
      $region32: #{basic_block_forward.3} parent=27 // pred_fallthru
        _
      // Predicated region
      $region33: #{basic_block_forward.3} parent=27 // pred_check
        %p189 = pneg %p120
      $region34: #{basic_block_forward.3} parent=27 // pred_check_branch
        %191 = sbr.rel (%p189) target = $region36
      $region35: #{basic_block_forward.3} parent=27 // pred_region
        %s192 = smul.u32 32, %s11
        %p193 = scmp.lt.s32.totalorder %s192, 63
        %s194 = scalar_select %p193, %s192, 63
        %s195 = smul.addr %s194, 8
        %s196 = scalar_lea.vmem %s4, %s195
        %s197 = smul.u32 32, %s11
      $region36: #{basic_block_forward.3} parent=27 // pred_fallthru
        _
    $region28: #{basic_block_forward.3} parent=5 // pred_fallthru
      _
    %p198 = scmp.le.s32.totalorder 1, %s11
    %p199 = scmp.lt.s32.totalorder %s11, 3
    %p200 = pnand %p198, %p199
    %p201 = pneg %p200
    // Predicated region
    $region37: #{basic_block_forward.3} parent=5 // pred_check
      _
    $region38: #{basic_block_forward.3} parent=5 // pred_check_branch
      %203 = sbr.rel (%p200) target = $region40
    $region39: #{basic_block_forward.3} parent=5 // pred_region
      %s204 = ssub.s32 %s11, 1
      %s205 = smul.u32 32, %s16
      %p206 = scmp.lt.s32.totalorder %s205, 63
      %s207 = scalar_select %p206, %s205, 63
      %s208 = smul.addr %s207, 4
      %s209 = scalar_lea.vmem %s0, %s208
      %p210 = pneg %p37
      %p211 = pneg %p34
      %p212 = pneg %p58
      %p213 = pneg %p55
      %p214 = pneg %p79
      %p215 = pneg %p76
      %p216 = pneg %p100
      %p217 = pneg %p97
      %s218 = smul.u32 32, %s16
      %p219 = scmp.lt.s32.totalorder %s218, 63
      %s220 = scalar_select %p219, %s218, 63
      %s221 = smul.addr %s220, 8
      %s222 = scalar_lea.vmem %s4, %s221
      %p223 = pneg %p126
      %p224 = pneg %p123
      %p225 = pneg %p152
      %p226 = pneg %p149
      %s227 = smul.u32 32, %s16
      %p228 = scmp.lt.s32.totalorder %s227, 63
      %s229 = scalar_select %p228, %s227, 63
      %s230 = smul.addr %s229, 8
      %s231 = scalar_lea.vmem %s5, %s230
      %s232 = smul.u32 32, %s16
      %p233 = scmp.lt.s32.totalorder %s232, 63
      %s234 = scalar_select %p233, %s232, 63
      %s235 = smul.addr %s234, 4
      %s236 = scalar_lea.vmem %s0, %s235
      %s237 = smul.u32 32, %s16
      %s238 = smul.u32 32, %s16
      %p239 = scmp.lt.s32.totalorder %s238, 63
      %s240 = scalar_select %p239, %s238, 63
      %s241 = smul.addr %s240, 8
      %s242 = scalar_lea.vmem %s4, %s241
      %s243 = smul.u32 32, %s16
      %s244 = smul.u32 32, %s16
      %p245 = scmp.lt.s32.totalorder %s244, 63
      %s246 = scalar_select %p245, %s244, 63
      %s247 = smul.addr %s246, 8
      %s248 = scalar_lea.vmem %s5, %s247
      %s249 = smul.u32 32, %s16
      %v251 = vld [vmem:[%s236] sm:$0xf]
      %v252 = vld [vmem:[%s236 + $0x4] sm:$0xf]
      %v253 = vld [vmem:[%s236 + $0x8] sm:$0xf]
      %v254 = vld [vmem:[%s236 + $0xc] sm:$0xf]
      %v255 = vld [vmem:[%s236 + $0x10] sm:$0xf]
      %v256 = vld [vmem:[%s236 + $0x14] sm:$0xf]
      %v257 = vld [vmem:[%s236 + $0x18] sm:$0xf]
      %v258 = vld [vmem:[%s236 + $0x1c] sm:$0xf]
      %v259 = vld [vmem:[%s236 + $0x20] sm:$0xf]
      %v260 = vld [vmem:[%s236 + $0x24] sm:$0xf]
      %v261 = vld [vmem:[%s236 + $0x28] sm:$0xf]
      %v262 = vld [vmem:[%s236 + $0x2c] sm:$0xf]
      %v263 = vld [vmem:[%s236 + $0x30] sm:$0xf]
      %v264 = vld [vmem:[%s236 + $0x34] sm:$0xf]
      %v265 = vld [vmem:[%s236 + $0x38] sm:$0xf]
      %v266 = vld [vmem:[%s236 + $0x3c] sm:$0xf]
      %v267 = vld [vmem:[%s236 + $0x40] sm:$0xf]
      %v268 = vld [vmem:[%s236 + $0x44] sm:$0xf]
      %v269 = vld [vmem:[%s236 + $0x48] sm:$0xf]
      %v270 = vld [vmem:[%s236 + $0x4c] sm:$0xf]
      %v271 = vld [vmem:[%s236 + $0x50] sm:$0xf]
      %v272 = vld [vmem:[%s236 + $0x54] sm:$0xf]
      %v273 = vld [vmem:[%s236 + $0x58] sm:$0xf]
      %v274 = vld [vmem:[%s236 + $0x5c] sm:$0xf]
      %v275 = vld [vmem:[%s236 + $0x60] sm:$0xf]
      %v276 = vld [vmem:[%s236 + $0x64] sm:$0xf]
      %v277 = vld [vmem:[%s236 + $0x68] sm:$0xf]
      %v278 = vld [vmem:[%s236 + $0x6c] sm:$0xf]
      %v279 = vld [vmem:[%s236 + $0x70] sm:$0xf]
      %v280 = vld [vmem:[%s236 + $0x74] sm:$0xf]
      %v281 = vld [vmem:[%s236 + $0x78] sm:$0xf]
      %v282 = vld [vmem:[%s236 + $0x7c] sm:$0xf]
      %v283 = vld [vmem:[%s1] sm:$0xf]
      %v284 = vld [vmem:[%s1 + $0x4] sm:$0xf]
      %v285 = vld [vmem:[%s1 + $0x8] sm:$0xf]
      %v286 = vld [vmem:[%s1 + $0xc] sm:$0xf]
      %v287 = vld [vmem:[%s1 + $0x10] sm:$0x3]
      %v320 = vunpack.c.l.b16 %v251
      %v321 = vunpack.c.l.b16 %v252
      %v322 = vunpack.c.l.b16 %v253
      %v323 = vunpack.c.l.b16 %v254
      %v324 = vunpack.c.l.b16 %v255
      %v325 = vunpack.c.l.b16 %v256
      %v326 = vunpack.c.l.b16 %v257
      %v327 = vunpack.c.l.b16 %v258
      %v328 = vunpack.c.l.b16 %v259
      %v329 = vunpack.c.l.b16 %v260
      %v330 = vunpack.c.l.b16 %v261
      %v331 = vunpack.c.l.b16 %v262
      %v332 = vunpack.c.l.b16 %v263
      %v333 = vunpack.c.l.b16 %v264
      %v334 = vunpack.c.l.b16 %v265
      %v335 = vunpack.c.l.b16 %v266
      %v336 = vunpack.c.l.b16 %v267
      %v337 = vunpack.c.l.b16 %v268
      %v338 = vunpack.c.l.b16 %v269
      %v339 = vunpack.c.l.b16 %v270
      %v340 = vunpack.c.l.b16 %v271
      %v341 = vunpack.c.l.b16 %v272
      %v342 = vunpack.c.l.b16 %v273
      %v343 = vunpack.c.l.b16 %v274
      %v344 = vunpack.c.l.b16 %v275
      %v345 = vunpack.c.l.b16 %v276
      %v346 = vunpack.c.l.b16 %v277
      %v347 = vunpack.c.l.b16 %v278
      %v348 = vunpack.c.l.b16 %v279
      %v349 = vunpack.c.l.b16 %v280
      %v350 = vunpack.c.l.b16 %v281
      %v351 = vunpack.c.l.b16 %v282
      %v352 = vpack.c.b16 %v321, %v320
      %v353 = vpack.c.b16 %v323, %v322
      %v354 = vpack.c.b16 %v325, %v324
      %v355 = vpack.c.b16 %v327, %v326
      %v356 = vpack.c.b16 %v329, %v328
      %v357 = vpack.c.b16 %v331, %v330
      %v358 = vpack.c.b16 %v333, %v332
      %v359 = vpack.c.b16 %v335, %v334
      %v360 = vpack.c.b16 %v337, %v336
      %v361 = vpack.c.b16 %v339, %v338
      %v362 = vpack.c.b16 %v341, %v340
      %v363 = vpack.c.b16 %v343, %v342
      %v364 = vpack.c.b16 %v345, %v344
      %v365 = vpack.c.b16 %v347, %v346
      %v366 = vpack.c.b16 %v349, %v348
      %v367 = vpack.c.b16 %v351, %v350
      %v373 = vunpack.c.l.b16 %v283
      %v374 = vunpack.c.l.b16 %v284
      %v375 = vunpack.c.l.b16 %v285
      %v376 = vunpack.c.l.b16 %v286
      %v377 = vunpack.c.l.b16 %v287
      %v378 = vpack.c.b16 %v374, %v373
      %v379 = vpack.c.b16 %v376, %v375
      %v380 = vpack.c.b16 %v377, %v377
      %vm383 = vcmask 293888
      %v385 = vsel %vm383, %v352, 0
      %v388 = vsel %vm383, %v353, 0
      %v391 = vsel %vm383, %v354, 0
      %v394 = vsel %vm383, %v355, 0
      %v397 = vsel %vm383, %v356, 0
      %v400 = vsel %vm383, %v357, 0
      %v403 = vsel %vm383, %v358, 0
      %v406 = vsel %vm383, %v359, 0
      %v409 = vsel %vm383, %v360, 0
      %v412 = vsel %vm383, %v361, 0
      %v415 = vsel %vm383, %v362, 0
      %v418 = vsel %vm383, %v363, 0
      %v421 = vsel %vm383, %v364, 0
      %v424 = vsel %vm383, %v365, 0
      %v427 = vsel %vm383, %v366, 0
      %v430 = vsel %vm383, %v367, 0
      %vm432 = vcmask 1041408
      %v434 = vsel %vm432, %v380, 0
      %436 = vmatprep.subr.bf16.mxu0 0
      %437 = vmatpush1.bf16.msra.mxu0 %v378
      %438 = vmatprep.subr.bf16.mxu0 0
      %439 = vmatpush1.bf16.msra.mxu0 %v379
      %440 = vmatprep.subr.bf16.mxu0 0
      %441 = vmatpush1.bf16.msra.mxu0 %v434
      %442 = vmatprep.subr.bf16.mxu0 0
      %443 = vmatpush1.bf16.msra.mxu0 0
      %444 = vmatprep.subr.bf16.mxu0 0
      %445 = vmatpush1.bf16.msra.mxu0 0
      %446 = vmatprep.subr.bf16.mxu0 0
      %447 = vmatpush1.bf16.msra.mxu0 0
      %448 = vmatprep.subr.bf16.mxu0 0
      %449 = vmatpush1.bf16.msra.mxu0 0
      %450 = vmatprep.subr.bf16.mxu0 0
      %451 = vmatpush1.bf16.msra.mxu0 0
      %452 = vmatprep.subr.bf16.mxu0 0
      %453 = vmatpush1.bf16.msra.mxu0 0
      %454 = vmatprep.subr.bf16.mxu0 0
      %455 = vmatpush1.bf16.msra.mxu0 0
      %456 = vmatprep.subr.bf16.mxu0 0
      %457 = vmatpush1.bf16.msra.mxu0 0
      %458 = vmatprep.subr.bf16.mxu0 0
      %459 = vmatpush1.bf16.msra.mxu0 0
      %460 = vmatprep.subr.bf16.mxu0 0
      %461 = vmatpush1.bf16.msra.mxu0 0
      %462 = vmatprep.subr.bf16.mxu0 0
      %463 = vmatpush1.bf16.msra.mxu0 0
      %464 = vmatprep.subr.bf16.mxu0 0
      %465 = vmatpush1.bf16.msra.mxu0 0
      %466 = vmatprep.subr.bf16.mxu0 0
      %467 = vmatpush1.bf16.msra.mxu0 0
      %468 = vmatprep.mubr.bf16.mxu0 0
      %469 = vmatmul.mubr.bf16.gmra.mrb[0].mxu0 %v385
      %v470 = vpop.f32.mrb[0].mxu0
      %v471 = vadd.f32 0.0, %v470
      %v472 = vpop.f32.mrb[0].mxu0
      %v473 = vpop.f32.mrb[0].mxu0
      %v474 = vadd.f32 0.0, %v473
      %v475 = vpop.f32.mrb[0].mxu0
      %476 = vmatprep.mubr.bf16.mxu0 0
      %477 = vmatmul.mubr.bf16.gmra.mrb[0].mxu0 %v388
      %v478 = vpop.f32.mrb[0].mxu0
      %v479 = vadd.f32 0.0, %v478
      %v480 = vpop.f32.mrb[0].mxu0
      %v481 = vpop.f32.mrb[0].mxu0
      %v482 = vadd.f32 0.0, %v481
      %v483 = vpop.f32.mrb[0].mxu0
      %484 = vmatprep.mubr.bf16.mxu0 0
      %485 = vmatmul.mubr.bf16.gmra.mrb[0].mxu0 %v391
      %v486 = vpop.f32.mrb[0].mxu0
      %v487 = vadd.f32 0.0, %v486
      %v488 = vpop.f32.mrb[0].mxu0
      %v489 = vpop.f32.mrb[0].mxu0
      %v490 = vadd.f32 0.0, %v489
      %v491 = vpop.f32.mrb[0].mxu0
      %492 = vmatprep.mubr.bf16.mxu0 0
      %493 = vmatmul.mubr.bf16.gmra.mrb[0].mxu0 %v394
      %v494 = vpop.f32.mrb[0].mxu0
      %v495 = vadd.f32 0.0, %v494
      %v496 = vpop.f32.mrb[0].mxu0
      %v497 = vpop.f32.mrb[0].mxu0
      %v498 = vadd.f32 0.0, %v497
      %v499 = vpop.f32.mrb[0].mxu0
      %500 = vmatprep.mubr.bf16.mxu0 0
      %501 = vmatmul.mubr.bf16.gmra.mrb[0].mxu0 %v397
      %v502 = vpop.f32.mrb[0].mxu0
      %v503 = vadd.f32 0.0, %v502
      %v504 = vpop.f32.mrb[0].mxu0
      %v505 = vpop.f32.mrb[0].mxu0
      %v506 = vadd.f32 0.0, %v505
      %v507 = vpop.f32.mrb[0].mxu0
      %508 = vmatprep.mubr.bf16.mxu0 0
      %509 = vmatmul.mubr.bf16.gmra.mrb[0].mxu0 %v400
      %v510 = vpop.f32.mrb[0].mxu0
      %v511 = vadd.f32 0.0, %v510
      %v512 = vpop.f32.mrb[0].mxu0
      %v513 = vpop.f32.mrb[0].mxu0
      %v514 = vadd.f32 0.0, %v513
      %v515 = vpop.f32.mrb[0].mxu0
      %516 = vmatprep.mubr.bf16.mxu0 0
      %517 = vmatmul.mubr.bf16.gmra.mrb[0].mxu0 %v403
      %v518 = vpop.f32.mrb[0].mxu0
      %v519 = vadd.f32 0.0, %v518
      %v520 = vpop.f32.mrb[0].mxu0
      %v521 = vpop.f32.mrb[0].mxu0
      %v522 = vadd.f32 0.0, %v521
      %v523 = vpop.f32.mrb[0].mxu0
      %524 = vmatprep.mubr.bf16.mxu0 0
      %525 = vmatmul.mubr.bf16.gmra.mrb[0].mxu0 %v406
      %v526 = vpop.f32.mrb[0].mxu0
      %v527 = vadd.f32 0.0, %v526
      %v528 = vpop.f32.mrb[0].mxu0
      %v529 = vpop.f32.mrb[0].mxu0
      %v530 = vadd.f32 0.0, %v529
      %v531 = vpop.f32.mrb[0].mxu0
      %532 = vmatprep.mubr.bf16.mxu0 0
      %533 = vmatmul.mubr.bf16.gmra.mrb[0].mxu0 %v409
      %v534 = vpop.f32.mrb[0].mxu0
      %v535 = vadd.f32 0.0, %v534
      %v536 = vpop.f32.mrb[0].mxu0
      %v537 = vpop.f32.mrb[0].mxu0
      %v538 = vadd.f32 0.0, %v537
      %v539 = vpop.f32.mrb[0].mxu0
      %540 = vmatprep.mubr.bf16.mxu0 0
      %541 = vmatmul.mubr.bf16.gmra.mrb[0].mxu0 %v412
      %v542 = vpop.f32.mrb[0].mxu0
      %v543 = vadd.f32 0.0, %v542
      %v544 = vpop.f32.mrb[0].mxu0
      %v545 = vpop.f32.mrb[0].mxu0
      %v546 = vadd.f32 0.0, %v545
      %v547 = vpop.f32.mrb[0].mxu0
      %548 = vmatprep.mubr.bf16.mxu0 0
      %549 = vmatmul.mubr.bf16.gmra.mrb[0].mxu0 %v415
      %v550 = vpop.f32.mrb[0].mxu0
      %v551 = vadd.f32 0.0, %v550
      %v552 = vpop.f32.mrb[0].mxu0
      %v553 = vpop.f32.mrb[0].mxu0
      %v554 = vadd.f32 0.0, %v553
      %v555 = vpop.f32.mrb[0].mxu0
      %556 = vmatprep.mubr.bf16.mxu0 0
      %557 = vmatmul.mubr.bf16.gmra.mrb[0].mxu0 %v418
      %v558 = vpop.f32.mrb[0].mxu0
      %v559 = vadd.f32 0.0, %v558
      %v560 = vpop.f32.mrb[0].mxu0
      %v561 = vpop.f32.mrb[0].mxu0
      %v562 = vadd.f32 0.0, %v561
      %v563 = vpop.f32.mrb[0].mxu0
      %564 = vmatprep.mubr.bf16.mxu0 0
      %565 = vmatmul.mubr.bf16.gmra.mrb[0].mxu0 %v421
      %v566 = vpop.f32.mrb[0].mxu0
      %v567 = vadd.f32 0.0, %v566
      %v568 = vpop.f32.mrb[0].mxu0
      %v569 = vpop.f32.mrb[0].mxu0
      %v570 = vadd.f32 0.0, %v569
      %v571 = vpop.f32.mrb[0].mxu0
      %572 = vmatprep.mubr.bf16.mxu0 0
      %573 = vmatmul.mubr.bf16.gmra.mrb[0].mxu0 %v424
      %v574 = vpop.f32.mrb[0].mxu0
      %v575 = vadd.f32 0.0, %v574
      %v576 = vpop.f32.mrb[0].mxu0
      %v577 = vpop.f32.mrb[0].mxu0
      %v578 = vadd.f32 0.0, %v577
      %v579 = vpop.f32.mrb[0].mxu0
      %580 = vmatprep.mubr.bf16.mxu0 0
      %581 = vmatmul.mubr.bf16.gmra.mrb[0].mxu0 %v427
      %v582 = vpop.f32.mrb[0].mxu0
      %v583 = vadd.f32 0.0, %v582
      %v584 = vpop.f32.mrb[0].mxu0
      %v585 = vpop.f32.mrb[0].mxu0
      %v586 = vadd.f32 0.0, %v585
      %v587 = vpop.f32.mrb[0].mxu0
      %588 = vmatprep.mubr.bf16.mxu0 0
      %589 = vmatmul.mubr.bf16.gmra.mrb[0].mxu0 %v430
      %v590 = vpop.f32.mrb[0].mxu0
      %v591 = vadd.f32 0.0, %v590
      %v592 = vpop.f32.mrb[0].mxu0
      %v593 = vpop.f32.mrb[0].mxu0
      %v594 = vadd.f32 0.0, %v593
      %v595 = vpop.f32.mrb[0].mxu0
      %596 = vdwg.mxu0
      %v597 = vld [vmem:[%s2] sm:$0x1]
      %v599 = vlaneseq
      %v600 = vshrl.u32 %v599, 7
      %v601 = vsub.s32 0, %v600
      %v602 = vrot.slane %v597, %v601
      %v604 = vmul.f32 %v471, %v602
      %v605 = vmul.f32 %v474, %v602
      %v606 = vmul.f32 %v479, %v602
      %v607 = vmul.f32 %v482, %v602
      %v608 = vmul.f32 %v487, %v602
      %v609 = vmul.f32 %v490, %v602
      %v610 = vmul.f32 %v495, %v602
      %v611 = vmul.f32 %v498, %v602
      %v612 = vmul.f32 %v503, %v602
      %v613 = vmul.f32 %v506, %v602
      %v614 = vmul.f32 %v511, %v602
      %v615 = vmul.f32 %v514, %v602
      %v616 = vmul.f32 %v519, %v602
      %v617 = vmul.f32 %v522, %v602
      %v618 = vmul.f32 %v527, %v602
      %v619 = vmul.f32 %v530, %v602
      %v620 = vmul.f32 %v535, %v602
      %v621 = vmul.f32 %v538, %v602
      %v622 = vmul.f32 %v543, %v602
      %v623 = vmul.f32 %v546, %v602
      %v624 = vmul.f32 %v551, %v602
      %v625 = vmul.f32 %v554, %v602
      %v626 = vmul.f32 %v559, %v602
      %v627 = vmul.f32 %v562, %v602
      %v628 = vmul.f32 %v567, %v602
      %v629 = vmul.f32 %v570, %v602
      %v630 = vmul.f32 %v575, %v602
      %v631 = vmul.f32 %v578, %v602
      %v632 = vmul.f32 %v583, %v602
      %v633 = vmul.f32 %v586, %v602
      %v634 = vmul.f32 %v591, %v602
      %v635 = vmul.f32 %v594, %v602
      %v636 = vld [vmem:[%s3] sm:$0x1]
      %v638 = vlaneseq
      %v639 = vshrl.u32 %v638, 7
      %v640 = vsub.s32 0, %v639
      %v641 = vrot.slane %v636, %v640
      %v643 = vadd.f32 %v604, %v641
      %v644 = vadd.f32 %v605, %v641
      %v645 = vadd.f32 %v606, %v641
      %v646 = vadd.f32 %v607, %v641
      %v647 = vadd.f32 %v608, %v641
      %v648 = vadd.f32 %v609, %v641
      %v649 = vadd.f32 %v610, %v641
      %v650 = vadd.f32 %v611, %v641
      %v651 = vadd.f32 %v612, %v641
      %v652 = vadd.f32 %v613, %v641
      %v653 = vadd.f32 %v614, %v641
      %v654 = vadd.f32 %v615, %v641
      %v655 = vadd.f32 %v616, %v641
      %v656 = vadd.f32 %v617, %v641
      %v657 = vadd.f32 %v618, %v641
      %v658 = vadd.f32 %v619, %v641
      %v659 = vadd.f32 %v620, %v641
      %v660 = vadd.f32 %v621, %v641
      %v661 = vadd.f32 %v622, %v641
      %v662 = vadd.f32 %v623, %v641
      %v663 = vadd.f32 %v624, %v641
      %v664 = vadd.f32 %v625, %v641
      %v665 = vadd.f32 %v626, %v641
      %v666 = vadd.f32 %v627, %v641
      %v667 = vadd.f32 %v628, %v641
      %v668 = vadd.f32 %v629, %v641
      %v669 = vadd.f32 %v630, %v641
      %v670 = vadd.f32 %v631, %v641
      %v671 = vadd.f32 %v632, %v641
      %v672 = vadd.f32 %v633, %v641
      %v673 = vadd.f32 %v634, %v641
      %v674 = vadd.f32 %v635, %v641
      %v675 = vld [vmem:[%s242] sm:$0xff]
      %v676 = vld [vmem:[%s242 + $0x8] sm:$0xff]
      %v677 = vld [vmem:[%s242 + $0x10] sm:$0xff]
      %v678 = vld [vmem:[%s242 + $0x18] sm:$0xff]
      %v679 = vld [vmem:[%s242 + $0x20] sm:$0xff]
      %v680 = vld [vmem:[%s242 + $0x28] sm:$0xff]
      %v681 = vld [vmem:[%s242 + $0x30] sm:$0xff]
      %v682 = vld [vmem:[%s242 + $0x38] sm:$0xff]
      %v683 = vld [vmem:[%s242 + $0x40] sm:$0xff]
      %v684 = vld [vmem:[%s242 + $0x48] sm:$0xff]
      %v685 = vld [vmem:[%s242 + $0x50] sm:$0xff]
      %v686 = vld [vmem:[%s242 + $0x58] sm:$0xff]
      %v687 = vld [vmem:[%s242 + $0x60] sm:$0xff]
      %v688 = vld [vmem:[%s242 + $0x68] sm:$0xff]
      %v689 = vld [vmem:[%s242 + $0x70] sm:$0xff]
      %v690 = vld [vmem:[%s242 + $0x78] sm:$0xff]
      %v691 = vld [vmem:[%s242 + $0x80] sm:$0xff]
      %v692 = vld [vmem:[%s242 + $0x88] sm:$0xff]
      %v693 = vld [vmem:[%s242 + $0x90] sm:$0xff]
      %v694 = vld [vmem:[%s242 + $0x98] sm:$0xff]
      %v695 = vld [vmem:[%s242 + $0xa0] sm:$0xff]
      %v696 = vld [vmem:[%s242 + $0xa8] sm:$0xff]
      %v697 = vld [vmem:[%s242 + $0xb0] sm:$0xff]
      %v698 = vld [vmem:[%s242 + $0xb8] sm:$0xff]
      %v699 = vld [vmem:[%s242 + $0xc0] sm:$0xff]
      %v700 = vld [vmem:[%s242 + $0xc8] sm:$0xff]
      %v701 = vld [vmem:[%s242 + $0xd0] sm:$0xff]
      %v702 = vld [vmem:[%s242 + $0xd8] sm:$0xff]
      %v703 = vld [vmem:[%s242 + $0xe0] sm:$0xff]
      %v704 = vld [vmem:[%s242 + $0xe8] sm:$0xff]
      %v705 = vld [vmem:[%s242 + $0xf0] sm:$0xff]
      %v706 = vld [vmem:[%s242 + $0xf8] sm:$0xff]
      %v707 = vadd.f32 %v643, %v675
      %v708 = vadd.f32 %v644, %v676
      %v709 = vadd.f32 %v645, %v677
      %v710 = vadd.f32 %v646, %v678
      %v711 = vadd.f32 %v647, %v679
      %v712 = vadd.f32 %v648, %v680
      %v713 = vadd.f32 %v649, %v681
      %v714 = vadd.f32 %v650, %v682
      %v715 = vadd.f32 %v651, %v683
      %v716 = vadd.f32 %v652, %v684
      %v717 = vadd.f32 %v653, %v685
      %v718 = vadd.f32 %v654, %v686
      %v719 = vadd.f32 %v655, %v687
      %v720 = vadd.f32 %v656, %v688
      %v721 = vadd.f32 %v657, %v689
      %v722 = vadd.f32 %v658, %v690
      %v723 = vadd.f32 %v659, %v691
      %v724 = vadd.f32 %v660, %v692
      %v725 = vadd.f32 %v661, %v693
      %v726 = vadd.f32 %v662, %v694
      %v727 = vadd.f32 %v663, %v695
      %v728 = vadd.f32 %v664, %v696
      %v729 = vadd.f32 %v665, %v697
      %v730 = vadd.f32 %v666, %v698
      %v731 = vadd.f32 %v667, %v699
      %v732 = vadd.f32 %v668, %v700
      %v733 = vadd.f32 %v669, %v701
      %v734 = vadd.f32 %v670, %v702
      %v735 = vadd.f32 %v671, %v703
      %v736 = vadd.f32 %v672, %v704
      %v737 = vadd.f32 %v673, %v705
      %v738 = vadd.f32 %v674, %v706
      %v739 = vmax.f32 %v707, 0.0
      %v740 = vmax.f32 %v708, 0.0
      %v741 = vmax.f32 %v709, 0.0
      %v742 = vmax.f32 %v710, 0.0
      %v743 = vmax.f32 %v711, 0.0
      %v744 = vmax.f32 %v712, 0.0
      %v745 = vmax.f32 %v713, 0.0
      %v746 = vmax.f32 %v714, 0.0
      %v747 = vmax.f32 %v715, 0.0
      %v748 = vmax.f32 %v716, 0.0
      %v749 = vmax.f32 %v717, 0.0
      %v750 = vmax.f32 %v718, 0.0
      %v751 = vmax.f32 %v719, 0.0
      %v752 = vmax.f32 %v720, 0.0
      %v753 = vmax.f32 %v721, 0.0
      %v754 = vmax.f32 %v722, 0.0
      %v755 = vmax.f32 %v723, 0.0
      %v756 = vmax.f32 %v724, 0.0
      %v757 = vmax.f32 %v725, 0.0
      %v758 = vmax.f32 %v726, 0.0
      %v759 = vmax.f32 %v727, 0.0
      %v760 = vmax.f32 %v728, 0.0
      %v761 = vmax.f32 %v729, 0.0
      %v762 = vmax.f32 %v730, 0.0
      %v763 = vmax.f32 %v731, 0.0
      %v764 = vmax.f32 %v732, 0.0
      %v765 = vmax.f32 %v733, 0.0
      %v766 = vmax.f32 %v734, 0.0
      %v767 = vmax.f32 %v735, 0.0
      %v768 = vmax.f32 %v736, 0.0
      %v769 = vmax.f32 %v737, 0.0
      %v770 = vmax.f32 %v738, 0.0
      %vm771 = vcmask 31744
      %772 = vst.msk [vmem:[%s248] sm:$0xff] %vm771, %v739
      %773 = vst.msk [vmem:[%s248 + $0x8] sm:$0xff] %vm771, %v740
      %774 = vst.msk [vmem:[%s248 + $0x10] sm:$0xff] %vm771, %v741
      %775 = vst.msk [vmem:[%s248 + $0x18] sm:$0xff] %vm771, %v742
      %776 = vst.msk [vmem:[%s248 + $0x20] sm:$0xff] %vm771, %v743
      %777 = vst.msk [vmem:[%s248 + $0x28] sm:$0xff] %vm771, %v744
      %778 = vst.msk [vmem:[%s248 + $0x30] sm:$0xff] %vm771, %v745
      %779 = vst.msk [vmem:[%s248 + $0x38] sm:$0xff] %vm771, %v746
      %780 = vst.msk [vmem:[%s248 + $0x40] sm:$0xff] %vm771, %v747
      %781 = vst.msk [vmem:[%s248 + $0x48] sm:$0xff] %vm771, %v748
      %782 = vst.msk [vmem:[%s248 + $0x50] sm:$0xff] %vm771, %v749
      %783 = vst.msk [vmem:[%s248 + $0x58] sm:$0xff] %vm771, %v750
      %784 = vst.msk [vmem:[%s248 + $0x60] sm:$0xff] %vm771, %v751
      %785 = vst.msk [vmem:[%s248 + $0x68] sm:$0xff] %vm771, %v752
      %786 = vst.msk [vmem:[%s248 + $0x70] sm:$0xff] %vm771, %v753
      %787 = vst.msk [vmem:[%s248 + $0x78] sm:$0xff] %vm771, %v754
      %788 = vst.msk [vmem:[%s248 + $0x80] sm:$0xff] %vm771, %v755
      %789 = vst.msk [vmem:[%s248 + $0x88] sm:$0xff] %vm771, %v756
      %790 = vst.msk [vmem:[%s248 + $0x90] sm:$0xff] %vm771, %v757
      %791 = vst.msk [vmem:[%s248 + $0x98] sm:$0xff] %vm771, %v758
      %792 = vst.msk [vmem:[%s248 + $0xa0] sm:$0xff] %vm771, %v759
      %793 = vst.msk [vmem:[%s248 + $0xa8] sm:$0xff] %vm771, %v760
      %794 = vst.msk [vmem:[%s248 + $0xb0] sm:$0xff] %vm771, %v761
      %795 = vst.msk [vmem:[%s248 + $0xb8] sm:$0xff] %vm771, %v762
      %796 = vst.msk [vmem:[%s248 + $0xc0] sm:$0xff] %vm771, %v763
      %797 = vst.msk [vmem:[%s248 + $0xc8] sm:$0xff] %vm771, %v764
      %798 = vst.msk [vmem:[%s248 + $0xd0] sm:$0xff] %vm771, %v765
      %799 = vst.msk [vmem:[%s248 + $0xd8] sm:$0xff] %vm771, %v766
      %800 = vst.msk [vmem:[%s248 + $0xe0] sm:$0xff] %vm771, %v767
      %801 = vst.msk [vmem:[%s248 + $0xe8] sm:$0xff] %vm771, %v768
      %802 = vst.msk [vmem:[%s248 + $0xf0] sm:$0xff] %vm771, %v769
      %803 = vst.msk [vmem:[%s248 + $0xf8] sm:$0xff] %vm771, %v770
      %s804 = smul.u32 32, %s16
      %p805 = scmp.lt.s32.totalorder %s804, 63
      %s806 = scalar_select %p805, %s804, 63
      %s807 = smul.addr %s806, 8
      %s808 = scalar_lea.vmem %s5, %s807
      // Predicated region
      $region41: #{basic_block_forward.3} parent=39 // pred_check
        %p809 = pneg %p149
      $region42: #{basic_block_forward.3} parent=39 // pred_check_branch
        %811 = sbr.rel (%p809) target = $region44
      $region43: #{basic_block_forward.3} parent=39 // pred_region
        %s812 = smul.u32 32, %s16
      $region44: #{basic_block_forward.3} parent=39 // pred_fallthru
        _
    $region40: #{basic_block_forward.3} parent=5 // pred_fallthru
      _
    %p813 = scmp.le.s32.totalorder 2, %s11
    // Predicated region
    $region45: #{basic_block_forward.3} parent=5 // pred_check
      %p814 = pneg %p813
    $region46: #{basic_block_forward.3} parent=5 // pred_check_branch
      %816 = sbr.rel (%p814) target = $region48
    $region47: #{basic_block_forward.3} parent=5 // pred_region
      %s817 = ssub.s32 %s11, 2
      // Predicated region
      $region49: #{basic_block_forward.3} parent=47 // pred_check
        %p818 = pneg %p155
      $region50: #{basic_block_forward.3} parent=47 // pred_check_branch
        %820 = sbr.rel (%p818) target = $region52
      $region51: #{basic_block_forward.3} parent=47 // pred_region
        %s821 = smul.u32 32, %s17
        %p822 = scmp.lt.s32.totalorder %s821, 63
        %s823 = scalar_select %p822, %s821, 63
        %s824 = smul.addr %s823, 8
        %s825 = scalar_lea.vmem %s5, %s824
      $region52: #{basic_block_forward.3} parent=47 // pred_fallthru
        _
    $region48: #{basic_block_forward.3} parent=5 // pred_fallthru
      _
  $region6: #{basic_block_forward.3} parent=0 // loop_footer
    %s15 = sadd.s32 1, %s11
  $region7: #{basic_block_forward.3} parent=0 // loop_footer_branch
    %10 = sbr.rel target = $region3
  $region8: #{basic_block_forward.3} parent=0 // loop_exit
    _

</llo_original>
